<compile_context>
chip_gen: v5e
topology: v5e:2x2
jax: 0.10.0
libtpu: 0.0.40
codegen_flags: <defaults>
</compile_context>

<pallas_src>
import functools

import jax
import jax.numpy as jnp
from jax import lax
from jax.experimental import pallas as pl
from jax.experimental.pallas import tpu as pltpu

K = 8                      # conv kernel size
C_IN = 3                   # input channels
C_OUT = 4                  # output channels of the final result
N_CONVS = 8                # number of convs in the original module
RB = 8                     # output rows produced per MXU matmul block
HBLK = 2 * RB              # input rows consumed per matmul block (16)
ROWS_PER_STEP = 32         # output rows per grid step (4 matmul blocks)
M_ROWS = 2 * C_OUT * RB    # 64  = (folded channel o in [0,8)) x (row r in [0,8))
CONTRACT = K * C_IN * HBLK # 384 = (kw, c, h) contraction length


def fold_params(weights, biases):
    """One-time host-side prep (hoisted out of the per-call path).

    Folds the elementwise DAG into two 4-channel convs and expands the folded
    (8, 3, 8, 8) weights into a banded (64, 384) matrix A such that, for an
    8-row output block starting at input row r0,
        res[o*8 + r, ow] = sum_k A[o*8 + r, k] * B[k, ow] + bias[o*8 + r]
    with B[kw*48 + c*16 + h, ow] = x[c, r0 + h, ow + kw],  h in [0, 16).
    """
    wf = weights.astype(jnp.float32)            # (8, 4, 3, 8, 8)
    bf = biases.astype(jnp.float32)             # (8, 4)
    # TODO(synk): the fold assumes finite conv outputs (0*inf / 0*nan differ).
    w_a = 2.0 * wf[4] + 2.0 * wf[5] + wf[6]     # v22 weights  (4, 3, 8, 8)
    w_b = wf[2] + wf[4]                         # v19 weights
    b_a = 2.0 * bf[4] + 2.0 * bf[5] + bf[6] + 1.0
    b_b = bf[2] + bf[4] - 1.0
    w_fold = jnp.concatenate([w_a, w_b], axis=0)    # (8, 3, 8, 8)  [o, c, kh, kw]
    b_fold = jnp.concatenate([b_a, b_b], axis=0)    # (8,)

    r = jnp.arange(RB)                              # output row within block
    h = jnp.arange(HBLK)                            # input row within block
    kh = h[None, :] - r[:, None]                    # (8, 16)
    valid = ((kh >= 0) & (kh < K)).astype(jnp.float32)
    kh_c = jnp.clip(kh, 0, K - 1)
    a5 = w_fold[:, :, kh_c, :]                      # (o, c, r, h, kw)
    a5 = a5 * valid[None, None, :, :, None]
    # -> (o, r, kw, c, h) then flatten to (64, 384); k order matches the
    #    in-kernel concatenate order (kw outer, c, then h).
    a_mat = jnp.transpose(a5, (0, 2, 4, 1, 3)).reshape(M_ROWS, CONTRACT)
    b_col = jnp.repeat(b_fold, RB).reshape(M_ROWS, 1)
    return a_mat, b_col


def _conv_dag_kernel(a_ref, b_ref, x_ref, o_ref, *, wo_p):
    # a_ref: (64, 384) banded folded weights   b_ref: (64, 1) folded bias
    # x_ref: (1, 3, HP, WP) zero-padded input  o_ref: (1, 4, 32, wo_p) output
    step = pl.program_id(1)
    a = a_ref[...]
    bias = b_ref[...]
    for j in range(ROWS_PER_STEP // RB):
        r0 = pl.multiple_of(step * ROWS_PER_STEP + j * RB, RB)
        xr = x_ref[0, :, pl.ds(r0, HBLK), :]                 # (3, 16, WP)
        cols = [xr[c, :, kw:kw + wo_p]                       # (16, wo_p) each
                for kw in range(K) for c in range(C_IN)]
        bmat = jnp.concatenate(cols, axis=0)                 # (384, wo_p)
        res = jnp.dot(a, bmat, preferred_element_type=jnp.float32) + bias
        v22 = res[0:C_OUT * RB, :]                           # (32, wo_p)
        v19 = res[C_OUT * RB:, :]                            # (32, wo_p)
        prod = v22 * v19
        for o in range(C_OUT):
            o_ref[0, o, j * RB:(j + 1) * RB, :] = prod[o * RB:(o + 1) * RB, :]


def model_forward(x, a_mat, b_col):
    """x: (N, 3, H, W) f32.  a_mat/b_col: outputs of fold_params."""
    n, cin, h, w = x.shape
    assert cin == C_IN and h >= K and w >= K
    ho, wo = h - K + 1, w - K + 1
    ho_p = ((ho + ROWS_PER_STEP - 1) // ROWS_PER_STEP) * ROWS_PER_STEP
    wo_p = max(64, ((wo + 63) // 64) * 64)
    hp = ho_p + HBLK                      # >= ho_p + 8 rows reachable in-kernel
    wp = wo_p + K                         # >= wo_p + 7 lanes reachable in-kernel
    xp = jnp.pad(x.astype(jnp.float32),
                 ((0, 0), (0, 0), (0, hp - h), (0, wp - w)))
    num_steps = ho_p // ROWS_PER_STEP

    flops = 2 * M_ROWS * CONTRACT * wo_p * (ROWS_PER_STEP // RB) * num_steps * n
    bytes_accessed = 4 * (n * C_IN * hp * wp + n * C_OUT * ho_p * wo_p
                          + M_ROWS * CONTRACT + M_ROWS)

    out = pl.pallas_call(
        functools.partial(_conv_dag_kernel, wo_p=wo_p),
        out_shape=jax.ShapeDtypeStruct((n, C_OUT, ho_p, wo_p), jnp.float32),
        grid=(n, num_steps),
        in_specs=[
            pl.BlockSpec((M_ROWS, CONTRACT), lambda b, s: (0, 0)),   # weights
            pl.BlockSpec((M_ROWS, 1), lambda b, s: (0, 0)),          # biases
            pl.BlockSpec((1, C_IN, hp, wp), lambda b, s: (b, 0, 0, 0)),  # raw x
        ],
        out_specs=pl.BlockSpec((1, C_OUT, ROWS_PER_STEP, wo_p),
                               lambda b, s: (b, 0, s, 0)),
        compiler_params=pltpu.CompilerParams(
            dimension_semantics=("parallel", "parallel")),
        cost_estimate=pl.CostEstimate(flops=flops, transcendentals=0,
                                      bytes_accessed=bytes_accessed),
    )(a_mat, b_col, xp)

    return out[:, :, :ho, :wo]


def reference_forward(x, weights, biases):
    """Pure-JAX reference implementing the original (unfolded) DAG."""
    def conv(k):
        return lax.conv_general_dilated(
            x, weights[k], window_strides=(1, 1), padding="VALID",
            dimension_numbers=("NCHW", "OIHW", "NCHW"),
            precision=lax.Precision.HIGHEST,
        ) + biases[k].reshape(1, C_OUT, 1, 1)

    c = [conv(k) for k in range(N_CONVS)]
    v1 = c[0] * 1.0
    v2 = c[1] + 1.0
    v3 = c[2] - 1.0
    v4 = c[3] * 0.0
    v5 = c[4] * 1.0
    v6 = c[5] + 1.0
    v7 = c[6] - 1.0
    v8 = c[7] * 0.0
    v9 = v4 + v5
    v10 = v5 + v6
    v11 = v6 + v7
    v12 = v7 + v8
    v13 = v3 + v12
    v14 = v4 + v9
    v15 = v5 + v10
    v16 = v6 + v11
    v17 = v7 + v12
    v18 = v8 + v9
    v19 = v3 + v18
    v20 = v14 + v16
    v21 = v16 + v18
    v22 = v18 + v21
    del v1, v2, v10, v13, v14, v15, v17, v20  # dead values in the graph
    return v22 * v19


if __name__ == "__main__":
    key = jax.random.PRNGKey(0)
    kx, kwt, kb = jax.random.split(key, 3)

    # Module spec: x1 = torch.randn(1, 3, 64, 64)
    x = jax.random.normal(kx, (1, 3, 64, 64), dtype=jnp.float32)

    fan_in = C_IN * K * K
    bound = 1.0 / (fan_in ** 0.5)
    weights = jax.random.uniform(kwt, (N_CONVS, C_OUT, C_IN, K, K),
                                 dtype=jnp.float32, minval=-bound, maxval=bound)
    biases = jax.random.uniform(kb, (N_CONVS, C_OUT), dtype=jnp.float32,
                                minval=-bound, maxval=bound)

    # One-time parameter folding / banded-weight construction (hoisted).
    a_mat, b_col = fold_params(weights, biases)

    fwd = jax.jit(model_forward)
    out = jax.block_until_ready(fwd(x, a_mat, b_col))

    ref = reference_forward(x, weights, biases)
    assert out.shape == ref.shape == (1, C_OUT, 57, 57), (out.shape, ref.shape)
    assert jnp.allclose(out, ref, rtol=2e-3, atol=2e-3), float(
        jnp.max(jnp.abs(out - ref)))

    print("KERNEL_OK")
</pallas_src>

<mosaic_0001>
module attributes {stable_mosaic.version = 11 : i64} {
  func.func @_conv_dag_kernel(%arg0: i32, %arg1: i32, %arg2: memref<64x384xf32, #tpu.memory_space<vmem>>, %arg3: memref<64x1xf32, #tpu.memory_space<vmem>>, %arg4: memref<1x3x80x72xf32, #tpu.memory_space<vmem>>, %arg5: memref<1x4x32x64xf32, #tpu.memory_space<vmem>>) attributes {dimension_semantics = [#tpu.dimension_semantics<parallel>, #tpu.dimension_semantics<parallel>], iteration_bounds = array<i64: 1, 2>, scalar_prefetch = 0 : i64, scratch_operands = 0 : i64, tpu.core_type = #tpu.core_type<tc>, window_params = [{pipeline_mode = #tpu.pipeline_mode<synchronous>, transform_indices = @transform_0, window_bounds = array<i64: 64, 384>}, {pipeline_mode = #tpu.pipeline_mode<synchronous>, transform_indices = @transform_1, window_bounds = array<i64: 64, 1>}, {transform_indices = @transform_2, window_bounds = array<i64: 1, 3, 80, 72>}, {transform_indices = @transform_3, window_bounds = array<i64: 1, 4, 32, 64>}]} {
    %c0 = arith.constant 0 : index
    %c0_0 = arith.constant 0 : index
    %0 = vector.load %arg2[%c0, %c0_0] : memref<64x384xf32, #tpu.memory_space<vmem>>, vector<64x384xf32>
    %c0_1 = arith.constant 0 : index
    %c0_2 = arith.constant 0 : index
    %1 = vector.load %arg3[%c0_1, %c0_2] : memref<64x1xf32, #tpu.memory_space<vmem>>, vector<64x1xf32>
    %c32_i32 = arith.constant 32 : i32
    %2 = arith.muli %arg1, %c32_i32 : i32
    %c0_i32 = arith.constant 0 : i32
    %3 = arith.addi %2, %c0_i32 : i32
    %4 = tpu.assume_multiple %3, 8 : i32
    %c0_3 = arith.constant 0 : index
    %c0_4 = arith.constant 0 : index
    %5 = arith.index_cast %4 : i32 to index
    %c0_5 = arith.constant 0 : index
    %6 = vector.load %arg4[%c0_3, %c0_4, %5, %c0_5] : memref<1x3x80x72xf32, #tpu.memory_space<vmem>>, vector<1x3x16x72xf32>
    %7 = vector.shape_cast %6 : vector<1x3x16x72xf32> to vector<3x16x72xf32>
    %8 = vector.extract_strided_slice %7 {offsets = [0, 0, 0], sizes = [1, 16, 64], strides = [1, 1, 1]} : vector<3x16x72xf32> to vector<1x16x64xf32>
    %9 = vector.shape_cast %8 : vector<1x16x64xf32> to vector<16x64xf32>
    %10 = vector.extract_strided_slice %7 {offsets = [1, 0, 0], sizes = [1, 16, 64], strides = [1, 1, 1]} : vector<3x16x72xf32> to vector<1x16x64xf32>
    %11 = vector.shape_cast %10 : vector<1x16x64xf32> to vector<16x64xf32>
    %12 = vector.extract_strided_slice %7 {offsets = [2, 0, 0], sizes = [1, 16, 64], strides = [1, 1, 1]} : vector<3x16x72xf32> to vector<1x16x64xf32>
    %13 = vector.shape_cast %12 : vector<1x16x64xf32> to vector<16x64xf32>
    %14 = vector.extract_strided_slice %7 {offsets = [0, 0, 1], sizes = [1, 16, 64], strides = [1, 1, 1]} : vector<3x16x72xf32> to vector<1x16x64xf32>
    %15 = vector.shape_cast %14 : vector<1x16x64xf32> to vector<16x64xf32>
    %16 = vector.extract_strided_slice %7 {offsets = [1, 0, 1], sizes = [1, 16, 64], strides = [1, 1, 1]} : vector<3x16x72xf32> to vector<1x16x64xf32>
    %17 = vector.shape_cast %16 : vector<1x16x64xf32> to vector<16x64xf32>
    %18 = vector.extract_strided_slice %7 {offsets = [2, 0, 1], sizes = [1, 16, 64], strides = [1, 1, 1]} : vector<3x16x72xf32> to vector<1x16x64xf32>
    %19 = vector.shape_cast %18 : vector<1x16x64xf32> to vector<16x64xf32>
    %20 = vector.extract_strided_slice %7 {offsets = [0, 0, 2], sizes = [1, 16, 64], strides = [1, 1, 1]} : vector<3x16x72xf32> to vector<1x16x64xf32>
    %21 = vector.shape_cast %20 : vector<1x16x64xf32> to vector<16x64xf32>
    %22 = vector.extract_strided_slice %7 {offsets = [1, 0, 2], sizes = [1, 16, 64], strides = [1, 1, 1]} : vector<3x16x72xf32> to vector<1x16x64xf32>
    %23 = vector.shape_cast %22 : vector<1x16x64xf32> to vector<16x64xf32>
    %24 = vector.extract_strided_slice %7 {offsets = [2, 0, 2], sizes = [1, 16, 64], strides = [1, 1, 1]} : vector<3x16x72xf32> to vector<1x16x64xf32>
    %25 = vector.shape_cast %24 : vector<1x16x64xf32> to vector<16x64xf32>
    %26 = vector.extract_strided_slice %7 {offsets = [0, 0, 3], sizes = [1, 16, 64], strides = [1, 1, 1]} : vector<3x16x72xf32> to vector<1x16x64xf32>
    %27 = vector.shape_cast %26 : vector<1x16x64xf32> to vector<16x64xf32>
    %28 = vector.extract_strided_slice %7 {offsets = [1, 0, 3], sizes = [1, 16, 64], strides = [1, 1, 1]} : vector<3x16x72xf32> to vector<1x16x64xf32>
    %29 = vector.shape_cast %28 : vector<1x16x64xf32> to vector<16x64xf32>
    %30 = vector.extract_strided_slice %7 {offsets = [2, 0, 3], sizes = [1, 16, 64], strides = [1, 1, 1]} : vector<3x16x72xf32> to vector<1x16x64xf32>
    %31 = vector.shape_cast %30 : vector<1x16x64xf32> to vector<16x64xf32>
    %32 = vector.extract_strided_slice %7 {offsets = [0, 0, 4], sizes = [1, 16, 64], strides = [1, 1, 1]} : vector<3x16x72xf32> to vector<1x16x64xf32>
    %33 = vector.shape_cast %32 : vector<1x16x64xf32> to vector<16x64xf32>
    %34 = vector.extract_strided_slice %7 {offsets = [1, 0, 4], sizes = [1, 16, 64], strides = [1, 1, 1]} : vector<3x16x72xf32> to vector<1x16x64xf32>
    %35 = vector.shape_cast %34 : vector<1x16x64xf32> to vector<16x64xf32>
    %36 = vector.extract_strided_slice %7 {offsets = [2, 0, 4], sizes = [1, 16, 64], strides = [1, 1, 1]} : vector<3x16x72xf32> to vector<1x16x64xf32>
    %37 = vector.shape_cast %36 : vector<1x16x64xf32> to vector<16x64xf32>
    %38 = vector.extract_strided_slice %7 {offsets = [0, 0, 5], sizes = [1, 16, 64], strides = [1, 1, 1]} : vector<3x16x72xf32> to vector<1x16x64xf32>
    %39 = vector.shape_cast %38 : vector<1x16x64xf32> to vector<16x64xf32>
    %40 = vector.extract_strided_slice %7 {offsets = [1, 0, 5], sizes = [1, 16, 64], strides = [1, 1, 1]} : vector<3x16x72xf32> to vector<1x16x64xf32>
    %41 = vector.shape_cast %40 : vector<1x16x64xf32> to vector<16x64xf32>
    %42 = vector.extract_strided_slice %7 {offsets = [2, 0, 5], sizes = [1, 16, 64], strides = [1, 1, 1]} : vector<3x16x72xf32> to vector<1x16x64xf32>
    %43 = vector.shape_cast %42 : vector<1x16x64xf32> to vector<16x64xf32>
    %44 = vector.extract_strided_slice %7 {offsets = [0, 0, 6], sizes = [1, 16, 64], strides = [1, 1, 1]} : vector<3x16x72xf32> to vector<1x16x64xf32>
    %45 = vector.shape_cast %44 : vector<1x16x64xf32> to vector<16x64xf32>
    %46 = vector.extract_strided_slice %7 {offsets = [1, 0, 6], sizes = [1, 16, 64], strides = [1, 1, 1]} : vector<3x16x72xf32> to vector<1x16x64xf32>
    %47 = vector.shape_cast %46 : vector<1x16x64xf32> to vector<16x64xf32>
    %48 = vector.extract_strided_slice %7 {offsets = [2, 0, 6], sizes = [1, 16, 64], strides = [1, 1, 1]} : vector<3x16x72xf32> to vector<1x16x64xf32>
    %49 = vector.shape_cast %48 : vector<1x16x64xf32> to vector<16x64xf32>
    %50 = vector.extract_strided_slice %7 {offsets = [0, 0, 7], sizes = [1, 16, 64], strides = [1, 1, 1]} : vector<3x16x72xf32> to vector<1x16x64xf32>
    %51 = vector.shape_cast %50 : vector<1x16x64xf32> to vector<16x64xf32>
    %52 = vector.extract_strided_slice %7 {offsets = [1, 0, 7], sizes = [1, 16, 64], strides = [1, 1, 1]} : vector<3x16x72xf32> to vector<1x16x64xf32>
    %53 = vector.shape_cast %52 : vector<1x16x64xf32> to vector<16x64xf32>
    %54 = vector.extract_strided_slice %7 {offsets = [2, 0, 7], sizes = [1, 16, 64], strides = [1, 1, 1]} : vector<3x16x72xf32> to vector<1x16x64xf32>
    %55 = vector.shape_cast %54 : vector<1x16x64xf32> to vector<16x64xf32>
    %56 = tpu.concatenate %9, %11, %13, %15, %17, %19, %21, %23, %25, %27, %29, %31, %33, %35, %37, %39 in 0 : vector<16x64xf32>, vector<16x64xf32>, vector<16x64xf32>, vector<16x64xf32>, vector<16x64xf32>, vector<16x64xf32>, vector<16x64xf32>, vector<16x64xf32>, vector<16x64xf32>, vector<16x64xf32>, vector<16x64xf32>, vector<16x64xf32>, vector<16x64xf32>, vector<16x64xf32>, vector<16x64xf32>, vector<16x64xf32> -> vector<256x64xf32>
    %57 = tpu.concatenate %41, %43, %45, %47, %49, %51, %53, %55 in 0 : vector<16x64xf32>, vector<16x64xf32>, vector<16x64xf32>, vector<16x64xf32>, vector<16x64xf32>, vector<16x64xf32>, vector<16x64xf32>, vector<16x64xf32> -> vector<128x64xf32>
    %58 = tpu.concatenate %56, %57 in 0 : vector<256x64xf32>, vector<128x64xf32> -> vector<384x64xf32>
    %cst = arith.constant dense<0.000000e+00> : vector<64x64xf32>
    %59 = tpu.matmul %0, %58, %cst {dimension_numbers = #tpu.dot_dimension_numbers<[1], [0], [0], [1], [0, 0, 1, 1], [], []>} : vector<64x384xf32>, vector<384x64xf32>, vector<64x64xf32> -> vector<64x64xf32>
    %60 = vector.broadcast %1 : vector<64x1xf32> to vector<64x64xf32>
    %61 = arith.addf %59, %60 : vector<64x64xf32>
    %62 = vector.extract_strided_slice %61 {offsets = [0, 0], sizes = [32, 64], strides = [1, 1]} : vector<64x64xf32> to vector<32x64xf32>
    %63 = vector.extract_strided_slice %61 {offsets = [32, 0], sizes = [32, 64], strides = [1, 1]} : vector<64x64xf32> to vector<32x64xf32>
    %64 = arith.mulf %62, %63 : vector<32x64xf32>
    %65 = vector.extract_strided_slice %64 {offsets = [0, 0], sizes = [8, 64], strides = [1, 1]} : vector<32x64xf32> to vector<8x64xf32>
    %c0_6 = arith.constant 0 : index
    %c0_7 = arith.constant 0 : index
    %c0_8 = arith.constant 0 : index
    %c0_9 = arith.constant 0 : index
    %66 = vector.load %arg5[%c0_6, %c0_7, %c0_8, %c0_9] : memref<1x4x32x64xf32, #tpu.memory_space<vmem>>, vector<1x1x8x64xf32>
    %67 = vector.shape_cast %66 : vector<1x1x8x64xf32> to vector<8x64xf32>
    %68 = vector.shape_cast %65 : vector<8x64xf32> to vector<1x1x8x64xf32>
    tpu.vector_store %arg5[%c0_6, %c0_7, %c0_8, %c0_9], %68 {strides = array<i32>} : memref<1x4x32x64xf32, #tpu.memory_space<vmem>>, vector<1x1x8x64xf32>,
    %69 = vector.extract_strided_slice %64 {offsets = [8, 0], sizes = [8, 64], strides = [1, 1]} : vector<32x64xf32> to vector<8x64xf32>
    %c0_10 = arith.constant 0 : index
    %c1 = arith.constant 1 : index
    %c0_11 = arith.constant 0 : index
    %c0_12 = arith.constant 0 : index
    %70 = vector.load %arg5[%c0_10, %c1, %c0_11, %c0_12] : memref<1x4x32x64xf32, #tpu.memory_space<vmem>>, vector<1x1x8x64xf32>
    %71 = vector.shape_cast %70 : vector<1x1x8x64xf32> to vector<8x64xf32>
    %72 = vector.shape_cast %69 : vector<8x64xf32> to vector<1x1x8x64xf32>
    tpu.vector_store %arg5[%c0_10, %c1, %c0_11, %c0_12], %72 {strides = array<i32>} : memref<1x4x32x64xf32, #tpu.memory_space<vmem>>, vector<1x1x8x64xf32>,
    %73 = vector.extract_strided_slice %64 {offsets = [16, 0], sizes = [8, 64], strides = [1, 1]} : vector<32x64xf32> to vector<8x64xf32>
    %c0_13 = arith.constant 0 : index
    %c2 = arith.constant 2 : index
    %c0_14 = arith.constant 0 : index
    %c0_15 = arith.constant 0 : index
    %74 = vector.load %arg5[%c0_13, %c2, %c0_14, %c0_15] : memref<1x4x32x64xf32, #tpu.memory_space<vmem>>, vector<1x1x8x64xf32>
    %75 = vector.shape_cast %74 : vector<1x1x8x64xf32> to vector<8x64xf32>
    %76 = vector.shape_cast %73 : vector<8x64xf32> to vector<1x1x8x64xf32>
    tpu.vector_store %arg5[%c0_13, %c2, %c0_14, %c0_15], %76 {strides = array<i32>} : memref<1x4x32x64xf32, #tpu.memory_space<vmem>>, vector<1x1x8x64xf32>,
    %77 = vector.extract_strided_slice %64 {offsets = [24, 0], sizes = [8, 64], strides = [1, 1]} : vector<32x64xf32> to vector<8x64xf32>
    %c0_16 = arith.constant 0 : index
    %c3 = arith.constant 3 : index
    %c0_17 = arith.constant 0 : index
    %c0_18 = arith.constant 0 : index
    %78 = vector.load %arg5[%c0_16, %c3, %c0_17, %c0_18] : memref<1x4x32x64xf32, #tpu.memory_space<vmem>>, vector<1x1x8x64xf32>
    %79 = vector.shape_cast %78 : vector<1x1x8x64xf32> to vector<8x64xf32>
    %80 = vector.shape_cast %77 : vector<8x64xf32> to vector<1x1x8x64xf32>
    tpu.vector_store %arg5[%c0_16, %c3, %c0_17, %c0_18], %80 {strides = array<i32>} : memref<1x4x32x64xf32, #tpu.memory_space<vmem>>, vector<1x1x8x64xf32>,
    %c32_i32_19 = arith.constant 32 : i32
    %81 = arith.muli %arg1, %c32_i32_19 : i32
    %c8_i32 = arith.constant 8 : i32
    %82 = arith.addi %81, %c8_i32 : i32
    %83 = tpu.assume_multiple %82, 8 : i32
    %c0_20 = arith.constant 0 : index
    %c0_21 = arith.constant 0 : index
    %84 = arith.index_cast %83 : i32 to index
    %c0_22 = arith.constant 0 : index
    %85 = vector.load %arg4[%c0_20, %c0_21, %84, %c0_22] : memref<1x3x80x72xf32, #tpu.memory_space<vmem>>, vector<1x3x16x72xf32>
    %86 = vector.shape_cast %85 : vector<1x3x16x72xf32> to vector<3x16x72xf32>
    %87 = vector.extract_strided_slice %86 {offsets = [0, 0, 0], sizes = [1, 16, 64], strides = [1, 1, 1]} : vector<3x16x72xf32> to vector<1x16x64xf32>
    %88 = vector.shape_cast %87 : vector<1x16x64xf32> to vector<16x64xf32>
    %89 = vector.extract_strided_slice %86 {offsets = [1, 0, 0], sizes = [1, 16, 64], strides = [1, 1, 1]} : vector<3x16x72xf32> to vector<1x16x64xf32>
    %90 = vector.shape_cast %89 : vector<1x16x64xf32> to vector<16x64xf32>
    %91 = vector.extract_strided_slice %86 {offsets = [2, 0, 0], sizes = [1, 16, 64], strides = [1, 1, 1]} : vector<3x16x72xf32> to vector<1x16x64xf32>
    %92 = vector.shape_cast %91 : vector<1x16x64xf32> to vector<16x64xf32>
    %93 = vector.extract_strided_slice %86 {offsets = [0, 0, 1], sizes = [1, 16, 64], strides = [1, 1, 1]} : vector<3x16x72xf32> to vector<1x16x64xf32>
    %94 = vector.shape_cast %93 : vector<1x16x64xf32> to vector<16x64xf32>
    %95 = vector.extract_strided_slice %86 {offsets = [1, 0, 1], sizes = [1, 16, 64], strides = [1, 1, 1]} : vector<3x16x72xf32> to vector<1x16x64xf32>
    %96 = vector.shape_cast %95 : vector<1x16x64xf32> to vector<16x64xf32>
    %97 = vector.extract_strided_slice %86 {offsets = [2, 0, 1], sizes = [1, 16, 64], strides = [1, 1, 1]} : vector<3x16x72xf32> to vector<1x16x64xf32>
    %98 = vector.shape_cast %97 : vector<1x16x64xf32> to vector<16x64xf32>
    %99 = vector.extract_strided_slice %86 {offsets = [0, 0, 2], sizes = [1, 16, 64], strides = [1, 1, 1]} : vector<3x16x72xf32> to vector<1x16x64xf32>
    %100 = vector.shape_cast %99 : vector<1x16x64xf32> to vector<16x64xf32>
    %101 = vector.extract_strided_slice %86 {offsets = [1, 0, 2], sizes = [1, 16, 64], strides = [1, 1, 1]} : vector<3x16x72xf32> to vector<1x16x64xf32>
    %102 = vector.shape_cast %101 : vector<1x16x64xf32> to vector<16x64xf32>
    %103 = vector.extract_strided_slice %86 {offsets = [2, 0, 2], sizes = [1, 16, 64], strides = [1, 1, 1]} : vector<3x16x72xf32> to vector<1x16x64xf32>
    %104 = vector.shape_cast %103 : vector<1x16x64xf32> to vector<16x64xf32>
    %105 = vector.extract_strided_slice %86 {offsets = [0, 0, 3], sizes = [1, 16, 64], strides = [1, 1, 1]} : vector<3x16x72xf32> to vector<1x16x64xf32>
    %106 = vector.shape_cast %105 : vector<1x16x64xf32> to vector<16x64xf32>
    %107 = vector.extract_strided_slice %86 {offsets = [1, 0, 3], sizes = [1, 16, 64], strides = [1, 1, 1]} : vector<3x16x72xf32> to vector<1x16x64xf32>
    %108 = vector.shape_cast %107 : vector<1x16x64xf32> to vector<16x64xf32>
    %109 = vector.extract_strided_slice %86 {offsets = [2, 0, 3], sizes = [1, 16, 64], strides = [1, 1, 1]} : vector<3x16x72xf32> to vector<1x16x64xf32>
    %110 = vector.shape_cast %109 : vector<1x16x64xf32> to vector<16x64xf32>
    %111 = vector.extract_strided_slice %86 {offsets = [0, 0, 4], sizes = [1, 16, 64], strides = [1, 1, 1]} : vector<3x16x72xf32> to vector<1x16x64xf32>
    %112 = vector.shape_cast %111 : vector<1x16x64xf32> to vector<16x64xf32>
    %113 = vector.extract_strided_slice %86 {offsets = [1, 0, 4], sizes = [1, 16, 64], strides = [1, 1, 1]} : vector<3x16x72xf32> to vector<1x16x64xf32>
    %114 = vector.shape_cast %113 : vector<1x16x64xf32> to vector<16x64xf32>
    %115 = vector.extract_strided_slice %86 {offsets = [2, 0, 4], sizes = [1, 16, 64], strides = [1, 1, 1]} : vector<3x16x72xf32> to vector<1x16x64xf32>
    %116 = vector.shape_cast %115 : vector<1x16x64xf32> to vector<16x64xf32>
    %117 = vector.extract_strided_slice %86 {offsets = [0, 0, 5], sizes = [1, 16, 64], strides = [1, 1, 1]} : vector<3x16x72xf32> to vector<1x16x64xf32>
    %118 = vector.shape_cast %117 : vector<1x16x64xf32> to vector<16x64xf32>
    %119 = vector.extract_strided_slice %86 {offsets = [1, 0, 5], sizes = [1, 16, 64], strides = [1, 1, 1]} : vector<3x16x72xf32> to vector<1x16x64xf32>
    %120 = vector.shape_cast %119 : vector<1x16x64xf32> to vector<16x64xf32>
    %121 = vector.extract_strided_slice %86 {offsets = [2, 0, 5], sizes = [1, 16, 64], strides = [1, 1, 1]} : vector<3x16x72xf32> to vector<1x16x64xf32>
    %122 = vector.shape_cast %121 : vector<1x16x64xf32> to vector<16x64xf32>
    %123 = vector.extract_strided_slice %86 {offsets = [0, 0, 6], sizes = [1, 16, 64], strides = [1, 1, 1]} : vector<3x16x72xf32> to vector<1x16x64xf32>
    %124 = vector.shape_cast %123 : vector<1x16x64xf32> to vector<16x64xf32>
    %125 = vector.extract_strided_slice %86 {offsets = [1, 0, 6], sizes = [1, 16, 64], strides = [1, 1, 1]} : vector<3x16x72xf32> to vector<1x16x64xf32>
    %126 = vector.shape_cast %125 : vector<1x16x64xf32> to vector<16x64xf32>
    %127 = vector.extract_strided_slice %86 {offsets = [2, 0, 6], sizes = [1, 16, 64], strides = [1, 1, 1]} : vector<3x16x72xf32> to vector<1x16x64xf32>
    %128 = vector.shape_cast %127 : vector<1x16x64xf32> to vector<16x64xf32>
    %129 = vector.extract_strided_slice %86 {offsets = [0, 0, 7], sizes = [1, 16, 64], strides = [1, 1, 1]} : vector<3x16x72xf32> to vector<1x16x64xf32>
    %130 = vector.shape_cast %129 : vector<1x16x64xf32> to vector<16x64xf32>
    %131 = vector.extract_strided_slice %86 {offsets = [1, 0, 7], sizes = [1, 16, 64], strides = [1, 1, 1]} : vector<3x16x72xf32> to vector<1x16x64xf32>
    %132 = vector.shape_cast %131 : vector<1x16x64xf32> to vector<16x64xf32>
    %133 = vector.extract_strided_slice %86 {offsets = [2, 0, 7], sizes = [1, 16, 64], strides = [1, 1, 1]} : vector<3x16x72xf32> to vector<1x16x64xf32>
    %134 = vector.shape_cast %133 : vector<1x16x64xf32> to vector<16x64xf32>
    %135 = tpu.concatenate %88, %90, %92, %94, %96, %98, %100, %102, %104, %106, %108, %110, %112, %114, %116, %118 in 0 : vector<16x64xf32>, vector<16x64xf32>, vector<16x64xf32>, vector<16x64xf32>, vector<16x64xf32>, vector<16x64xf32>, vector<16x64xf32>, vector<16x64xf32>, vector<16x64xf32>, vector<16x64xf32>, vector<16x64xf32>, vector<16x64xf32>, vector<16x64xf32>, vector<16x64xf32>, vector<16x64xf32>, vector<16x64xf32> -> vector<256x64xf32>
    %136 = tpu.concatenate %120, %122, %124, %126, %128, %130, %132, %134 in 0 : vector<16x64xf32>, vector<16x64xf32>, vector<16x64xf32>, vector<16x64xf32>, vector<16x64xf32>, vector<16x64xf32>, vector<16x64xf32>, vector<16x64xf32> -> vector<128x64xf32>
    %137 = tpu.concatenate %135, %136 in 0 : vector<256x64xf32>, vector<128x64xf32> -> vector<384x64xf32>
    %cst_23 = arith.constant dense<0.000000e+00> : vector<64x64xf32>
    %138 = tpu.matmul %0, %137, %cst_23 {dimension_numbers = #tpu.dot_dimension_numbers<[1], [0], [0], [1], [0, 0, 1, 1], [], []>} : vector<64x384xf32>, vector<384x64xf32>, vector<64x64xf32> -> vector<64x64xf32>
    %139 = vector.broadcast %1 : vector<64x1xf32> to vector<64x64xf32>
    %140 = arith.addf %138, %139 : vector<64x64xf32>
    %141 = vector.extract_strided_slice %140 {offsets = [0, 0], sizes = [32, 64], strides = [1, 1]} : vector<64x64xf32> to vector<32x64xf32>
    %142 = vector.extract_strided_slice %140 {offsets = [32, 0], sizes = [32, 64], strides = [1, 1]} : vector<64x64xf32> to vector<32x64xf32>
    %143 = arith.mulf %141, %142 : vector<32x64xf32>
    %144 = vector.extract_strided_slice %143 {offsets = [0, 0], sizes = [8, 64], strides = [1, 1]} : vector<32x64xf32> to vector<8x64xf32>
    %c0_24 = arith.constant 0 : index
    %c0_25 = arith.constant 0 : index
    %c8 = arith.constant 8 : index
    %c0_26 = arith.constant 0 : index
    %145 = vector.load %arg5[%c0_24, %c0_25, %c8, %c0_26] : memref<1x4x32x64xf32, #tpu.memory_space<vmem>>, vector<1x1x8x64xf32>
    %146 = vector.shape_cast %145 : vector<1x1x8x64xf32> to vector<8x64xf32>
    %147 = vector.shape_cast %144 : vector<8x64xf32> to vector<1x1x8x64xf32>
    tpu.vector_store %arg5[%c0_24, %c0_25, %c8, %c0_26], %147 {strides = array<i32>} : memref<1x4x32x64xf32, #tpu.memory_space<vmem>>, vector<1x1x8x64xf32>,
    %148 = vector.extract_strided_slice %143 {offsets = [8, 0], sizes = [8, 64], strides = [1, 1]} : vector<32x64xf32> to vector<8x64xf32>
    %c0_27 = arith.constant 0 : index
    %c1_28 = arith.constant 1 : index
    %c8_29 = arith.constant 8 : index
    %c0_30 = arith.constant 0 : index
    %149 = vector.load %arg5[%c0_27, %c1_28, %c8_29, %c0_30] : memref<1x4x32x64xf32, #tpu.memory_space<vmem>>, vector<1x1x8x64xf32>
    %150 = vector.shape_cast %149 : vector<1x1x8x64xf32> to vector<8x64xf32>
    %151 = vector.shape_cast %148 : vector<8x64xf32> to vector<1x1x8x64xf32>
    tpu.vector_store %arg5[%c0_27, %c1_28, %c8_29, %c0_30], %151 {strides = array<i32>} : memref<1x4x32x64xf32, #tpu.memory_space<vmem>>, vector<1x1x8x64xf32>,
    %152 = vector.extract_strided_slice %143 {offsets = [16, 0], sizes = [8, 64], strides = [1, 1]} : vector<32x64xf32> to vector<8x64xf32>
    %c0_31 = arith.constant 0 : index
    %c2_32 = arith.constant 2 : index
    %c8_33 = arith.constant 8 : index
    %c0_34 = arith.constant 0 : index
    %153 = vector.load %arg5[%c0_31, %c2_32, %c8_33, %c0_34] : memref<1x4x32x64xf32, #tpu.memory_space<vmem>>, vector<1x1x8x64xf32>
    %154 = vector.shape_cast %153 : vector<1x1x8x64xf32> to vector<8x64xf32>
    %155 = vector.shape_cast %152 : vector<8x64xf32> to vector<1x1x8x64xf32>
    tpu.vector_store %arg5[%c0_31, %c2_32, %c8_33, %c0_34], %155 {strides = array<i32>} : memref<1x4x32x64xf32, #tpu.memory_space<vmem>>, vector<1x1x8x64xf32>,
    %156 = vector.extract_strided_slice %143 {offsets = [24, 0], sizes = [8, 64], strides = [1, 1]} : vector<32x64xf32> to vector<8x64xf32>
    %c0_35 = arith.constant 0 : index
    %c3_36 = arith.constant 3 : index
    %c8_37 = arith.constant 8 : index
    %c0_38 = arith.constant 0 : index
    %157 = vector.load %arg5[%c0_35, %c3_36, %c8_37, %c0_38] : memref<1x4x32x64xf32, #tpu.memory_space<vmem>>, vector<1x1x8x64xf32>
    %158 = vector.shape_cast %157 : vector<1x1x8x64xf32> to vector<8x64xf32>
    %159 = vector.shape_cast %156 : vector<8x64xf32> to vector<1x1x8x64xf32>
    tpu.vector_store %arg5[%c0_35, %c3_36, %c8_37, %c0_38], %159 {strides = array<i32>} : memref<1x4x32x64xf32, #tpu.memory_space<vmem>>, vector<1x1x8x64xf32>,
    %c32_i32_39 = arith.constant 32 : i32
    %160 = arith.muli %arg1, %c32_i32_39 : i32
    %c16_i32 = arith.constant 16 : i32
    %161 = arith.addi %160, %c16_i32 : i32
    %162 = tpu.assume_multiple %161, 8 : i32
    %c0_40 = arith.constant 0 : index
    %c0_41 = arith.constant 0 : index
    %163 = arith.index_cast %162 : i32 to index
    %c0_42 = arith.constant 0 : index
    %164 = vector.load %arg4[%c0_40, %c0_41, %163, %c0_42] : memref<1x3x80x72xf32, #tpu.memory_space<vmem>>, vector<1x3x16x72xf32>
    %165 = vector.shape_cast %164 : vector<1x3x16x72xf32> to vector<3x16x72xf32>
    %166 = vector.extract_strided_slice %165 {offsets = [0, 0, 0], sizes = [1, 16, 64], strides = [1, 1, 1]} : vector<3x16x72xf32> to vector<1x16x64xf32>
    %167 = vector.shape_cast %166 : vector<1x16x64xf32> to vector<16x64xf32>
    %168 = vector.extract_strided_slice %165 {offsets = [1, 0, 0], sizes = [1, 16, 64], strides = [1, 1, 1]} : vector<3x16x72xf32> to vector<1x16x64xf32>
    %169 = vector.shape_cast %168 : vector<1x16x64xf32> to vector<16x64xf32>
    %170 = vector.extract_strided_slice %165 {offsets = [2, 0, 0], sizes = [1, 16, 64], strides = [1, 1, 1]} : vector<3x16x72xf32> to vector<1x16x64xf32>
    %171 = vector.shape_cast %170 : vector<1x16x64xf32> to vector<16x64xf32>
    %172 = vector.extract_strided_slice %165 {offsets = [0, 0, 1], sizes = [1, 16, 64], strides = [1, 1, 1]} : vector<3x16x72xf32> to vector<1x16x64xf32>
    %173 = vector.shape_cast %172 : vector<1x16x64xf32> to vector<16x64xf32>
    %174 = vector.extract_strided_slice %165 {offsets = [1, 0, 1], sizes = [1, 16, 64], strides = [1, 1, 1]} : vector<3x16x72xf32> to vector<1x16x64xf32>
    %175 = vector.shape_cast %174 : vector<1x16x64xf32> to vector<16x64xf32>
    %176 = vector.extract_strided_slice %165 {offsets = [2, 0, 1], sizes = [1, 16, 64], strides = [1, 1, 1]} : vector<3x16x72xf32> to vector<1x16x64xf32>
    %177 = vector.shape_cast %176 : vector<1x16x64xf32> to vector<16x64xf32>
    %178 = vector.extract_strided_slice %165 {offsets = [0, 0, 2], sizes = [1, 16, 64], strides = [1, 1, 1]} : vector<3x16x72xf32> to vector<1x16x64xf32>
    %179 = vector.shape_cast %178 : vector<1x16x64xf32> to vector<16x64xf32>
    %180 = vector.extract_strided_slice %165 {offsets = [1, 0, 2], sizes = [1, 16, 64], strides = [1, 1, 1]} : vector<3x16x72xf32> to vector<1x16x64xf32>
    %181 = vector.shape_cast %180 : vector<1x16x64xf32> to vector<16x64xf32>
    %182 = vector.extract_strided_slice %165 {offsets = [2, 0, 2], sizes = [1, 16, 64], strides = [1, 1, 1]} : vector<3x16x72xf32> to vector<1x16x64xf32>
    %183 = vector.shape_cast %182 : vector<1x16x64xf32> to vector<16x64xf32>
    %184 = vector.extract_strided_slice %165 {offsets = [0, 0, 3], sizes = [1, 16, 64], strides = [1, 1, 1]} : vector<3x16x72xf32> to vector<1x16x64xf32>
    %185 = vector.shape_cast %184 : vector<1x16x64xf32> to vector<16x64xf32>
    %186 = vector.extract_strided_slice %165 {offsets = [1, 0, 3], sizes = [1, 16, 64], strides = [1, 1, 1]} : vector<3x16x72xf32> to vector<1x16x64xf32>
    %187 = vector.shape_cast %186 : vector<1x16x64xf32> to vector<16x64xf32>
    %188 = vector.extract_strided_slice %165 {offsets = [2, 0, 3], sizes = [1, 16, 64], strides = [1, 1, 1]} : vector<3x16x72xf32> to vector<1x16x64xf32>
    %189 = vector.shape_cast %188 : vector<1x16x64xf32> to vector<16x64xf32>
    %190 = vector.extract_strided_slice %165 {offsets = [0, 0, 4], sizes = [1, 16, 64], strides = [1, 1, 1]} : vector<3x16x72xf32> to vector<1x16x64xf32>
    %191 = vector.shape_cast %190 : vector<1x16x64xf32> to vector<16x64xf32>
    %192 = vector.extract_strided_slice %165 {offsets = [1, 0, 4], sizes = [1, 16, 64], strides = [1, 1, 1]} : vector<3x16x72xf32> to vector<1x16x64xf32>
    %193 = vector.shape_cast %192 : vector<1x16x64xf32> to vector<16x64xf32>
    %194 = vector.extract_strided_slice %165 {offsets = [2, 0, 4], sizes = [1, 16, 64], strides = [1, 1, 1]} : vector<3x16x72xf32> to vector<1x16x64xf32>
    %195 = vector.shape_cast %194 : vector<1x16x64xf32> to vector<16x64xf32>
    %196 = vector.extract_strided_slice %165 {offsets = [0, 0, 5], sizes = [1, 16, 64], strides = [1, 1, 1]} : vector<3x16x72xf32> to vector<1x16x64xf32>
    %197 = vector.shape_cast %196 : vector<1x16x64xf32> to vector<16x64xf32>
    %198 = vector.extract_strided_slice %165 {offsets = [1, 0, 5], sizes = [1, 16, 64], strides = [1, 1, 1]} : vector<3x16x72xf32> to vector<1x16x64xf32>
    %199 = vector.shape_cast %198 : vector<1x16x64xf32> to vector<16x64xf32>
    %200 = vector.extract_strided_slice %165 {offsets = [2, 0, 5], sizes = [1, 16, 64], strides = [1, 1, 1]} : vector<3x16x72xf32> to vector<1x16x64xf32>
    %201 = vector.shape_cast %200 : vector<1x16x64xf32> to vector<16x64xf32>
    %202 = vector.extract_strided_slice %165 {offsets = [0, 0, 6], sizes = [1, 16, 64], strides = [1, 1, 1]} : vector<3x16x72xf32> to vector<1x16x64xf32>
    %203 = vector.shape_cast %202 : vector<1x16x64xf32> to vector<16x64xf32>
    %204 = vector.extract_strided_slice %165 {offsets = [1, 0, 6], sizes = [1, 16, 64], strides = [1, 1, 1]} : vector<3x16x72xf32> to vector<1x16x64xf32>
    %205 = vector.shape_cast %204 : vector<1x16x64xf32> to vector<16x64xf32>
    %206 = vector.extract_strided_slice %165 {offsets = [2, 0, 6], sizes = [1, 16, 64], strides = [1, 1, 1]} : vector<3x16x72xf32> to vector<1x16x64xf32>
    %207 = vector.shape_cast %206 : vector<1x16x64xf32> to vector<16x64xf32>
    %208 = vector.extract_strided_slice %165 {offsets = [0, 0, 7], sizes = [1, 16, 64], strides = [1, 1, 1]} : vector<3x16x72xf32> to vector<1x16x64xf32>
    %209 = vector.shape_cast %208 : vector<1x16x64xf32> to vector<16x64xf32>
    %210 = vector.extract_strided_slice %165 {offsets = [1, 0, 7], sizes = [1, 16, 64], strides = [1, 1, 1]} : vector<3x16x72xf32> to vector<1x16x64xf32>
    %211 = vector.shape_cast %210 : vector<1x16x64xf32> to vector<16x64xf32>
    %212 = vector.extract_strided_slice %165 {offsets = [2, 0, 7], sizes = [1, 16, 64], strides = [1, 1, 1]} : vector<3x16x72xf32> to vector<1x16x64xf32>
    %213 = vector.shape_cast %212 : vector<1x16x64xf32> to vector<16x64xf32>
    %214 = tpu.concatenate %167, %169, %171, %173, %175, %177, %179, %181, %183, %185, %187, %189, %191, %193, %195, %197 in 0 : vector<16x64xf32>, vector<16x64xf32>, vector<16x64xf32>, vector<16x64xf32>, vector<16x64xf32>, vector<16x64xf32>, vector<16x64xf32>, vector<16x64xf32>, vector<16x64xf32>, vector<16x64xf32>, vector<16x64xf32>, vector<16x64xf32>, vector<16x64xf32>, vector<16x64xf32>, vector<16x64xf32>, vector<16x64xf32> -> vector<256x64xf32>
    %215 = tpu.concatenate %199, %201, %203, %205, %207, %209, %211, %213 in 0 : vector<16x64xf32>, vector<16x64xf32>, vector<16x64xf32>, vector<16x64xf32>, vector<16x64xf32>, vector<16x64xf32>, vector<16x64xf32>, vector<16x64xf32> -> vector<128x64xf32>
    %216 = tpu.concatenate %214, %215 in 0 : vector<256x64xf32>, vector<128x64xf32> -> vector<384x64xf32>
    %cst_43 = arith.constant dense<0.000000e+00> : vector<64x64xf32>
    %217 = tpu.matmul %0, %216, %cst_43 {dimension_numbers = #tpu.dot_dimension_numbers<[1], [0], [0], [1], [0, 0, 1, 1], [], []>} : vector<64x384xf32>, vector<384x64xf32>, vector<64x64xf32> -> vector<64x64xf32>
    %218 = vector.broadcast %1 : vector<64x1xf32> to vector<64x64xf32>
    %219 = arith.addf %217, %218 : vector<64x64xf32>
    %220 = vector.extract_strided_slice %219 {offsets = [0, 0], sizes = [32, 64], strides = [1, 1]} : vector<64x64xf32> to vector<32x64xf32>
    %221 = vector.extract_strided_slice %219 {offsets = [32, 0], sizes = [32, 64], strides = [1, 1]} : vector<64x64xf32> to vector<32x64xf32>
    %222 = arith.mulf %220, %221 : vector<32x64xf32>
    %223 = vector.extract_strided_slice %222 {offsets = [0, 0], sizes = [8, 64], strides = [1, 1]} : vector<32x64xf32> to vector<8x64xf32>
    %c0_44 = arith.constant 0 : index
    %c0_45 = arith.constant 0 : index
    %c16 = arith.constant 16 : index
    %c0_46 = arith.constant 0 : index
    %224 = vector.load %arg5[%c0_44, %c0_45, %c16, %c0_46] : memref<1x4x32x64xf32, #tpu.memory_space<vmem>>, vector<1x1x8x64xf32>
    %225 = vector.shape_cast %224 : vector<1x1x8x64xf32> to vector<8x64xf32>
    %226 = vector.shape_cast %223 : vector<8x64xf32> to vector<1x1x8x64xf32>
    tpu.vector_store %arg5[%c0_44, %c0_45, %c16, %c0_46], %226 {strides = array<i32>} : memref<1x4x32x64xf32, #tpu.memory_space<vmem>>, vector<1x1x8x64xf32>,
    %227 = vector.extract_strided_slice %222 {offsets = [8, 0], sizes = [8, 64], strides = [1, 1]} : vector<32x64xf32> to vector<8x64xf32>
    %c0_47 = arith.constant 0 : index
    %c1_48 = arith.constant 1 : index
    %c16_49 = arith.constant 16 : index
    %c0_50 = arith.constant 0 : index
    %228 = vector.load %arg5[%c0_47, %c1_48, %c16_49, %c0_50] : memref<1x4x32x64xf32, #tpu.memory_space<vmem>>, vector<1x1x8x64xf32>
    %229 = vector.shape_cast %228 : vector<1x1x8x64xf32> to vector<8x64xf32>
    %230 = vector.shape_cast %227 : vector<8x64xf32> to vector<1x1x8x64xf32>
    tpu.vector_store %arg5[%c0_47, %c1_48, %c16_49, %c0_50], %230 {strides = array<i32>} : memref<1x4x32x64xf32, #tpu.memory_space<vmem>>, vector<1x1x8x64xf32>,
    %231 = vector.extract_strided_slice %222 {offsets = [16, 0], sizes = [8, 64], strides = [1, 1]} : vector<32x64xf32> to vector<8x64xf32>
    %c0_51 = arith.constant 0 : index
    %c2_52 = arith.constant 2 : index
    %c16_53 = arith.constant 16 : index
    %c0_54 = arith.constant 0 : index
    %232 = vector.load %arg5[%c0_51, %c2_52, %c16_53, %c0_54] : memref<1x4x32x64xf32, #tpu.memory_space<vmem>>, vector<1x1x8x64xf32>
    %233 = vector.shape_cast %232 : vector<1x1x8x64xf32> to vector<8x64xf32>
    %234 = vector.shape_cast %231 : vector<8x64xf32> to vector<1x1x8x64xf32>
    tpu.vector_store %arg5[%c0_51, %c2_52, %c16_53, %c0_54], %234 {strides = array<i32>} : memref<1x4x32x64xf32, #tpu.memory_space<vmem>>, vector<1x1x8x64xf32>,
    %235 = vector.extract_strided_slice %222 {offsets = [24, 0], sizes = [8, 64], strides = [1, 1]} : vector<32x64xf32> to vector<8x64xf32>
    %c0_55 = arith.constant 0 : index
    %c3_56 = arith.constant 3 : index
    %c16_57 = arith.constant 16 : index
    %c0_58 = arith.constant 0 : index
    %236 = vector.load %arg5[%c0_55, %c3_56, %c16_57, %c0_58] : memref<1x4x32x64xf32, #tpu.memory_space<vmem>>, vector<1x1x8x64xf32>
    %237 = vector.shape_cast %236 : vector<1x1x8x64xf32> to vector<8x64xf32>
    %238 = vector.shape_cast %235 : vector<8x64xf32> to vector<1x1x8x64xf32>
    tpu.vector_store %arg5[%c0_55, %c3_56, %c16_57, %c0_58], %238 {strides = array<i32>} : memref<1x4x32x64xf32, #tpu.memory_space<vmem>>, vector<1x1x8x64xf32>,
    %c32_i32_59 = arith.constant 32 : i32
    %239 = arith.muli %arg1, %c32_i32_59 : i32
    %c24_i32 = arith.constant 24 : i32
    %240 = arith.addi %239, %c24_i32 : i32
    %241 = tpu.assume_multiple %240, 8 : i32
    %c0_60 = arith.constant 0 : index
    %c0_61 = arith.constant 0 : index
    %242 = arith.index_cast %241 : i32 to index
    %c0_62 = arith.constant 0 : index
    %243 = vector.load %arg4[%c0_60, %c0_61, %242, %c0_62] : memref<1x3x80x72xf32, #tpu.memory_space<vmem>>, vector<1x3x16x72xf32>
    %244 = vector.shape_cast %243 : vector<1x3x16x72xf32> to vector<3x16x72xf32>
    %245 = vector.extract_strided_slice %244 {offsets = [0, 0, 0], sizes = [1, 16, 64], strides = [1, 1, 1]} : vector<3x16x72xf32> to vector<1x16x64xf32>
    %246 = vector.shape_cast %245 : vector<1x16x64xf32> to vector<16x64xf32>
    %247 = vector.extract_strided_slice %244 {offsets = [1, 0, 0], sizes = [1, 16, 64], strides = [1, 1, 1]} : vector<3x16x72xf32> to vector<1x16x64xf32>
    %248 = vector.shape_cast %247 : vector<1x16x64xf32> to vector<16x64xf32>
    %249 = vector.extract_strided_slice %244 {offsets = [2, 0, 0], sizes = [1, 16, 64], strides = [1, 1, 1]} : vector<3x16x72xf32> to vector<1x16x64xf32>
    %250 = vector.shape_cast %249 : vector<1x16x64xf32> to vector<16x64xf32>
    %251 = vector.extract_strided_slice %244 {offsets = [0, 0, 1], sizes = [1, 16, 64], strides = [1, 1, 1]} : vector<3x16x72xf32> to vector<1x16x64xf32>
    %252 = vector.shape_cast %251 : vector<1x16x64xf32> to vector<16x64xf32>
    %253 = vector.extract_strided_slice %244 {offsets = [1, 0, 1], sizes = [1, 16, 64], strides = [1, 1, 1]} : vector<3x16x72xf32> to vector<1x16x64xf32>
    %254 = vector.shape_cast %253 : vector<1x16x64xf32> to vector<16x64xf32>
    %255 = vector.extract_strided_slice %244 {offsets = [2, 0, 1], sizes = [1, 16, 64], strides = [1, 1, 1]} : vector<3x16x72xf32> to vector<1x16x64xf32>
    %256 = vector.shape_cast %255 : vector<1x16x64xf32> to vector<16x64xf32>
    %257 = vector.extract_strided_slice %244 {offsets = [0, 0, 2], sizes = [1, 16, 64], strides = [1, 1, 1]} : vector<3x16x72xf32> to vector<1x16x64xf32>
    %258 = vector.shape_cast %257 : vector<1x16x64xf32> to vector<16x64xf32>
    %259 = vector.extract_strided_slice %244 {offsets = [1, 0, 2], sizes = [1, 16, 64], strides = [1, 1, 1]} : vector<3x16x72xf32> to vector<1x16x64xf32>
    %260 = vector.shape_cast %259 : vector<1x16x64xf32> to vector<16x64xf32>
    %261 = vector.extract_strided_slice %244 {offsets = [2, 0, 2], sizes = [1, 16, 64], strides = [1, 1, 1]} : vector<3x16x72xf32> to vector<1x16x64xf32>
    %262 = vector.shape_cast %261 : vector<1x16x64xf32> to vector<16x64xf32>
    %263 = vector.extract_strided_slice %244 {offsets = [0, 0, 3], sizes = [1, 16, 64], strides = [1, 1, 1]} : vector<3x16x72xf32> to vector<1x16x64xf32>
    %264 = vector.shape_cast %263 : vector<1x16x64xf32> to vector<16x64xf32>
    %265 = vector.extract_strided_slice %244 {offsets = [1, 0, 3], sizes = [1, 16, 64], strides = [1, 1, 1]} : vector<3x16x72xf32> to vector<1x16x64xf32>
    %266 = vector.shape_cast %265 : vector<1x16x64xf32> to vector<16x64xf32>
    %267 = vector.extract_strided_slice %244 {offsets = [2, 0, 3], sizes = [1, 16, 64], strides = [1, 1, 1]} : vector<3x16x72xf32> to vector<1x16x64xf32>
    %268 = vector.shape_cast %267 : vector<1x16x64xf32> to vector<16x64xf32>
    %269 = vector.extract_strided_slice %244 {offsets = [0, 0, 4], sizes = [1, 16, 64], strides = [1, 1, 1]} : vector<3x16x72xf32> to vector<1x16x64xf32>
    %270 = vector.shape_cast %269 : vector<1x16x64xf32> to vector<16x64xf32>
    %271 = vector.extract_strided_slice %244 {offsets = [1, 0, 4], sizes = [1, 16, 64], strides = [1, 1, 1]} : vector<3x16x72xf32> to vector<1x16x64xf32>
    %272 = vector.shape_cast %271 : vector<1x16x64xf32> to vector<16x64xf32>
    %273 = vector.extract_strided_slice %244 {offsets = [2, 0, 4], sizes = [1, 16, 64], strides = [1, 1, 1]} : vector<3x16x72xf32> to vector<1x16x64xf32>
    %274 = vector.shape_cast %273 : vector<1x16x64xf32> to vector<16x64xf32>
    %275 = vector.extract_strided_slice %244 {offsets = [0, 0, 5], sizes = [1, 16, 64], strides = [1, 1, 1]} : vector<3x16x72xf32> to vector<1x16x64xf32>
    %276 = vector.shape_cast %275 : vector<1x16x64xf32> to vector<16x64xf32>
    %277 = vector.extract_strided_slice %244 {offsets = [1, 0, 5], sizes = [1, 16, 64], strides = [1, 1, 1]} : vector<3x16x72xf32> to vector<1x16x64xf32>
    %278 = vector.shape_cast %277 : vector<1x16x64xf32> to vector<16x64xf32>
    %279 = vector.extract_strided_slice %244 {offsets = [2, 0, 5], sizes = [1, 16, 64], strides = [1, 1, 1]} : vector<3x16x72xf32> to vector<1x16x64xf32>
    %280 = vector.shape_cast %279 : vector<1x16x64xf32> to vector<16x64xf32>
    %281 = vector.extract_strided_slice %244 {offsets = [0, 0, 6], sizes = [1, 16, 64], strides = [1, 1, 1]} : vector<3x16x72xf32> to vector<1x16x64xf32>
    %282 = vector.shape_cast %281 : vector<1x16x64xf32> to vector<16x64xf32>
    %283 = vector.extract_strided_slice %244 {offsets = [1, 0, 6], sizes = [1, 16, 64], strides = [1, 1, 1]} : vector<3x16x72xf32> to vector<1x16x64xf32>
    %284 = vector.shape_cast %283 : vector<1x16x64xf32> to vector<16x64xf32>
    %285 = vector.extract_strided_slice %244 {offsets = [2, 0, 6], sizes = [1, 16, 64], strides = [1, 1, 1]} : vector<3x16x72xf32> to vector<1x16x64xf32>
    %286 = vector.shape_cast %285 : vector<1x16x64xf32> to vector<16x64xf32>
    %287 = vector.extract_strided_slice %244 {offsets = [0, 0, 7], sizes = [1, 16, 64], strides = [1, 1, 1]} : vector<3x16x72xf32> to vector<1x16x64xf32>
    %288 = vector.shape_cast %287 : vector<1x16x64xf32> to vector<16x64xf32>
    %289 = vector.extract_strided_slice %244 {offsets = [1, 0, 7], sizes = [1, 16, 64], strides = [1, 1, 1]} : vector<3x16x72xf32> to vector<1x16x64xf32>
    %290 = vector.shape_cast %289 : vector<1x16x64xf32> to vector<16x64xf32>
    %291 = vector.extract_strided_slice %244 {offsets = [2, 0, 7], sizes = [1, 16, 64], strides = [1, 1, 1]} : vector<3x16x72xf32> to vector<1x16x64xf32>
    %292 = vector.shape_cast %291 : vector<1x16x64xf32> to vector<16x64xf32>
    %293 = tpu.concatenate %246, %248, %250, %252, %254, %256, %258, %260, %262, %264, %266, %268, %270, %272, %274, %276 in 0 : vector<16x64xf32>, vector<16x64xf32>, vector<16x64xf32>, vector<16x64xf32>, vector<16x64xf32>, vector<16x64xf32>, vector<16x64xf32>, vector<16x64xf32>, vector<16x64xf32>, vector<16x64xf32>, vector<16x64xf32>, vector<16x64xf32>, vector<16x64xf32>, vector<16x64xf32>, vector<16x64xf32>, vector<16x64xf32> -> vector<256x64xf32>
    %294 = tpu.concatenate %278, %280, %282, %284, %286, %288, %290, %292 in 0 : vector<16x64xf32>, vector<16x64xf32>, vector<16x64xf32>, vector<16x64xf32>, vector<16x64xf32>, vector<16x64xf32>, vector<16x64xf32>, vector<16x64xf32> -> vector<128x64xf32>
    %295 = tpu.concatenate %293, %294 in 0 : vector<256x64xf32>, vector<128x64xf32> -> vector<384x64xf32>
    %cst_63 = arith.constant dense<0.000000e+00> : vector<64x64xf32>
    %296 = tpu.matmul %0, %295, %cst_63 {dimension_numbers = #tpu.dot_dimension_numbers<[1], [0], [0], [1], [0, 0, 1, 1], [], []>} : vector<64x384xf32>, vector<384x64xf32>, vector<64x64xf32> -> vector<64x64xf32>
    %297 = vector.broadcast %1 : vector<64x1xf32> to vector<64x64xf32>
    %298 = arith.addf %296, %297 : vector<64x64xf32>
    %299 = vector.extract_strided_slice %298 {offsets = [0, 0], sizes = [32, 64], strides = [1, 1]} : vector<64x64xf32> to vector<32x64xf32>
    %300 = vector.extract_strided_slice %298 {offsets = [32, 0], sizes = [32, 64], strides = [1, 1]} : vector<64x64xf32> to vector<32x64xf32>
    %301 = arith.mulf %299, %300 : vector<32x64xf32>
    %302 = vector.extract_strided_slice %301 {offsets = [0, 0], sizes = [8, 64], strides = [1, 1]} : vector<32x64xf32> to vector<8x64xf32>
    %c0_64 = arith.constant 0 : index
    %c0_65 = arith.constant 0 : index
    %c24 = arith.constant 24 : index
    %c0_66 = arith.constant 0 : index
    %303 = vector.load %arg5[%c0_64, %c0_65, %c24, %c0_66] : memref<1x4x32x64xf32, #tpu.memory_space<vmem>>, vector<1x1x8x64xf32>
    %304 = vector.shape_cast %303 : vector<1x1x8x64xf32> to vector<8x64xf32>
    %305 = vector.shape_cast %302 : vector<8x64xf32> to vector<1x1x8x64xf32>
    tpu.vector_store %arg5[%c0_64, %c0_65, %c24, %c0_66], %305 {strides = array<i32>} : memref<1x4x32x64xf32, #tpu.memory_space<vmem>>, vector<1x1x8x64xf32>,
    %306 = vector.extract_strided_slice %301 {offsets = [8, 0], sizes = [8, 64], strides = [1, 1]} : vector<32x64xf32> to vector<8x64xf32>
    %c0_67 = arith.constant 0 : index
    %c1_68 = arith.constant 1 : index
    %c24_69 = arith.constant 24 : index
    %c0_70 = arith.constant 0 : index
    %307 = vector.load %arg5[%c0_67, %c1_68, %c24_69, %c0_70] : memref<1x4x32x64xf32, #tpu.memory_space<vmem>>, vector<1x1x8x64xf32>
    %308 = vector.shape_cast %307 : vector<1x1x8x64xf32> to vector<8x64xf32>
    %309 = vector.shape_cast %306 : vector<8x64xf32> to vector<1x1x8x64xf32>
    tpu.vector_store %arg5[%c0_67, %c1_68, %c24_69, %c0_70], %309 {strides = array<i32>} : memref<1x4x32x64xf32, #tpu.memory_space<vmem>>, vector<1x1x8x64xf32>,
    %310 = vector.extract_strided_slice %301 {offsets = [16, 0], sizes = [8, 64], strides = [1, 1]} : vector<32x64xf32> to vector<8x64xf32>
    %c0_71 = arith.constant 0 : index
    %c2_72 = arith.constant 2 : index
    %c24_73 = arith.constant 24 : index
    %c0_74 = arith.constant 0 : index
    %311 = vector.load %arg5[%c0_71, %c2_72, %c24_73, %c0_74] : memref<1x4x32x64xf32, #tpu.memory_space<vmem>>, vector<1x1x8x64xf32>
    %312 = vector.shape_cast %311 : vector<1x1x8x64xf32> to vector<8x64xf32>
    %313 = vector.shape_cast %310 : vector<8x64xf32> to vector<1x1x8x64xf32>
    tpu.vector_store %arg5[%c0_71, %c2_72, %c24_73, %c0_74], %313 {strides = array<i32>} : memref<1x4x32x64xf32, #tpu.memory_space<vmem>>, vector<1x1x8x64xf32>,
    %314 = vector.extract_strided_slice %301 {offsets = [24, 0], sizes = [8, 64], strides = [1, 1]} : vector<32x64xf32> to vector<8x64xf32>
    %c0_75 = arith.constant 0 : index
    %c3_76 = arith.constant 3 : index
    %c24_77 = arith.constant 24 : index
    %c0_78 = arith.constant 0 : index
    %315 = vector.load %arg5[%c0_75, %c3_76, %c24_77, %c0_78] : memref<1x4x32x64xf32, #tpu.memory_space<vmem>>, vector<1x1x8x64xf32>
    %316 = vector.shape_cast %315 : vector<1x1x8x64xf32> to vector<8x64xf32>
    %317 = vector.shape_cast %314 : vector<8x64xf32> to vector<1x1x8x64xf32>
    tpu.vector_store %arg5[%c0_75, %c3_76, %c24_77, %c0_78], %317 {strides = array<i32>} : memref<1x4x32x64xf32, #tpu.memory_space<vmem>>, vector<1x1x8x64xf32>,
    return
  }
  func.func @transform_0(%arg0: i32, %arg1: i32) -> (i32, i32) {
    %c0_i32 = arith.constant 0 : i32
    %c0_i32_0 = arith.constant 0 : i32
    %c0_i32_1 = arith.constant 0 : i32
    return %c0_i32, %c0_i32_0 : i32, i32
  }
  func.func @transform_1(%arg0: i32, %arg1: i32) -> (i32, i32) {
    %c0_i32 = arith.constant 0 : i32
    %c0_i32_0 = arith.constant 0 : i32
    %c0_i32_1 = arith.constant 0 : i32
    return %c0_i32, %c0_i32_0 : i32, i32
  }
  func.func @transform_2(%arg0: i32, %arg1: i32) -> (i32, i32, i32, i32) {
    %c0_i32 = arith.constant 0 : i32
    %c0_i32_0 = arith.constant 0 : i32
    %c0_i32_1 = arith.constant 0 : i32
    %c0_i32_2 = arith.constant 0 : i32
    return %arg0, %c0_i32, %c0_i32_0, %c0_i32_1 : i32, i32, i32, i32
  }
  func.func @transform_3(%arg0: i32, %arg1: i32) -> (i32, i32, i32, i32) {
    %c0_i32 = arith.constant 0 : i32
    %c0_i32_0 = arith.constant 0 : i32
    %c0_i32_1 = arith.constant 0 : i32
    return %arg0, %c0_i32, %arg1, %c0_i32_0 : i32, i32, i32, i32
  }
}

</mosaic_0001>

<llo_original>
// kernel: model_forward.1
$region0: #{model_forward.1}
  #allocation0 [shape = 'u32[]', space=smem, size = 0x4, offset = 0x4, fixed_abs, tag = 'smem constant byte address 0x4 - core index']
  #allocation1 [shape = 'u32[72,128]{1,0:T(1,128)}', space=vmem, size = 0x9000, scoped, tag = 'internal scratch']
  %s0 = inlined_call_operand.vmem [shape: f32[64,384], index: 0, kind: input, shape index: {}]
  %s1 = inlined_call_operand.vmem [shape: f32[64,1], index: 1, kind: input, shape index: {}]
  %s2 = inlined_call_operand.vmem [shape: f32[1,3,80,72], index: 2, kind: input, shape index: {}]
  %s3 = inlined_call_operand.vmem [shape: f32[1,4,64,64], index: 3, kind: output, shape index: {}]
  %s4 = sld [smem:[#allocation0]]
  $region79: #{model_forward.1} parent=0
    _
  %s6 = ssub.s32 1, %s4
  %s7 = scalar_select 0, %s6, %s4
  $region1: #{model_forward.1} parent=0
    #allocation2 [shape = 'u8[131072]{0}', space=vmem, size = 0x20000, scoped, tag = 'output window, operand 0']
    loop: start=0, step=1, limit=4
    $region2: #{model_forward.1} parent=1 // loop_pre_header
      _
    $region3: #{model_forward.1} parent=1 // loop_header
      %s9 = sphi 0, %s13
      %p10 = scmp.ge.s32.totalorder %s9, 4
      %s16 = sphi 0, %s28
      %s17 = sphi 0, %s24
      %s18 = sphi 0, %s16
      %s19 = sphi 0, %s17
      %s20 = sphi 0, %s18
      %s21 = sphi 0, %s19
      %s29 = sphi 0, %s29
      %s31 = sphi 0, %s29
      %s32 = sphi 0, %s31
      %s46 = sphi 0, %s32
      %s50 = sphi 0, %s50
      %s52 = sphi 0, %s50
      %s53 = sphi 0, %s52
      %s67 = sphi 0, %s53
      %s73 = sphi 0, %s75
      %s76 = sphi 0, %s73
      %s77 = sphi 0, %s76
      %s93 = sphi 0, %s77
      %s101 = sphi 0, %s103
      %s104 = sphi 0, %s101
      %s105 = sphi 0, %s104
      %s121 = sphi 0, %s105
    $region4: #{model_forward.1} parent=1 // loop_header_branch
      %12 = sbr.rel (%p10) target = $region8
    $region5: #{model_forward.1} parent=1 // loop_body
      %s14 = ssub.s32 %s9, 1
      %s15 = ssub.s32 %s9, 2
      %s22 = sadd.s32 1, %s17
      %p23 = scmp.ge.s32.totalorder %s22, 2
      %s24 = scalar_select %p23, 0, %s22
      %s25 = sadd.s32 1, %s16
      %s26 = scalar_select %p23, %s25, %s16
      %p27 = scmp.ge.s32.totalorder %s26, 1
      %s28 = scalar_select %p27, 0, %s26
      %s30 = sadd.s32 %s29, 1
      %p33 = scmp.eq.s32.totalorder %s9, 1
      %p34 = scmp.ne.s32.totalorder %s29, %s31
      %p35 = scmp.eq.s32.totalorder %s9, 0
      %p36 = por %p34, %p35
      %p37 = scmp.ne.s32.totalorder %s29, %s31
      %p38 = scmp.eq.s32.totalorder %s14, 1
      %p39 = por %p37, %p38
      %p40 = scmp.ne.s32.totalorder %s31, %s32
      %p41 = scmp.eq.s32.totalorder %s14, 0
      %p42 = por %p40, %p41
      %p43 = scmp.ne.s32.totalorder %s31, %s32
      %p44 = scmp.eq.s32.totalorder %s15, 1
      %p45 = por %p43, %p44
      %p47 = scmp.ne.s32.totalorder %s32, %s46
      %p48 = scmp.eq.s32.totalorder %s15, 0
      %p49 = por %p47, %p48
      %s51 = sadd.s32 %s50, 1
      %p54 = scmp.eq.s32.totalorder %s9, 1
      %p55 = scmp.ne.s32.totalorder %s50, %s52
      %p56 = scmp.eq.s32.totalorder %s9, 0
      %p57 = por %p55, %p56
      %p58 = scmp.ne.s32.totalorder %s50, %s52
      %p59 = scmp.eq.s32.totalorder %s14, 1
      %p60 = por %p58, %p59
      %p61 = scmp.ne.s32.totalorder %s52, %s53
      %p62 = scmp.eq.s32.totalorder %s14, 0
      %p63 = por %p61, %p62
      %p64 = scmp.ne.s32.totalorder %s52, %s53
      %p65 = scmp.eq.s32.totalorder %s15, 1
      %p66 = por %p64, %p65
      %p68 = scmp.ne.s32.totalorder %s53, %s67
      %p69 = scmp.eq.s32.totalorder %s15, 0
      %p70 = por %p68, %p69
      %s71 = ssub.s32 %s16, %s28
      %p72 = scmp.eq.s32.totalorder %s71, 0
      %s74 = sadd.s32 %s73, 1
      %s75 = scalar_select %p72, %s73, %s74
      %p78 = pneg %p72
      %p79 = scmp.eq.s32.totalorder %s9, 1
      %p80 = por %p78, %p79
      %p81 = scmp.ne.s32.totalorder %s73, %s76
      %p82 = scmp.eq.s32.totalorder %s9, 0
      %p83 = por %p81, %p82
      %p84 = scmp.ne.s32.totalorder %s73, %s76
      %p85 = scmp.eq.s32.totalorder %s14, 1
      %p86 = por %p84, %p85
      %p87 = scmp.ne.s32.totalorder %s76, %s77
      %p88 = scmp.eq.s32.totalorder %s14, 0
      %p89 = por %p87, %p88
      %p90 = scmp.ne.s32.totalorder %s76, %s77
      %p91 = scmp.eq.s32.totalorder %s15, 1
      %p92 = por %p90, %p91
      %p94 = scmp.ne.s32.totalorder %s77, %s93
      %p95 = scmp.eq.s32.totalorder %s15, 0
      %p96 = por %p94, %p95
      %s97 = ssub.s32 %s16, %s28
      %s98 = ssub.s32 %s17, %s24
      %s99 = sor.u32 %s97, %s98
      %p100 = scmp.eq.s32.totalorder %s99, 0
      %s102 = sadd.s32 %s101, 1
      %s103 = scalar_select %p100, %s101, %s102
      %p106 = pneg %p100
      %p107 = scmp.eq.s32.totalorder %s9, 1
      %p108 = por %p106, %p107
      %p109 = scmp.ne.s32.totalorder %s101, %s104
      %p110 = scmp.eq.s32.totalorder %s9, 0
      %p111 = por %p109, %p110
      %p112 = scmp.ne.s32.totalorder %s101, %s104
      %p113 = scmp.eq.s32.totalorder %s14, 1
      %p114 = por %p112, %p113
      %p115 = scmp.ne.s32.totalorder %s104, %s105
      %p116 = scmp.eq.s32.totalorder %s14, 0
      %p117 = por %p115, %p116
      %p118 = scmp.ne.s32.totalorder %s104, %s105
      %p119 = scmp.eq.s32.totalorder %s15, 1
      %p120 = por %p118, %p119
      %p122 = scmp.ne.s32.totalorder %s105, %s121
      %p123 = scmp.eq.s32.totalorder %s15, 0
      %p124 = por %p122, %p123
      %p125 = scmp.le.s32.totalorder 1, %s9
      %p126 = scmp.lt.s32.totalorder %s9, 3
      %p127 = pnand %p125, %p126
      %p128 = pneg %p127
      // Predicated region
      $region9: #{model_forward.1} parent=5 // pred_check
        _
      $region10: #{model_forward.1} parent=5 // pred_check_branch
        %130 = sbr.rel (%p127) target = $region12
      $region11: #{model_forward.1} parent=5 // pred_region
        %s131 = ssub.s32 %s9, 1
        // Predicated region
        $region13: #{model_forward.1} parent=11 // pred_check
          %p132 = pneg %p42
        $region14: #{model_forward.1} parent=11 // pred_check_branch
          %134 = sbr.rel (%p132) target = $region16
        $region15: #{model_forward.1} parent=11 // pred_region
          _
        $region16: #{model_forward.1} parent=11 // pred_fallthru
          _
        // Predicated region
        $region17: #{model_forward.1} parent=11 // pred_check
          %p135 = pneg %p63
        $region18: #{model_forward.1} parent=11 // pred_check_branch
          %137 = sbr.rel (%p135) target = $region20
        $region19: #{model_forward.1} parent=11 // pred_region
          _
        $region20: #{model_forward.1} parent=11 // pred_fallthru
          _
        // Predicated region
        $region21: #{model_forward.1} parent=11 // pred_check
          %p138 = pneg %p89
        $region22: #{model_forward.1} parent=11 // pred_check_branch
          %140 = sbr.rel (%p138) target = $region24
        $region23: #{model_forward.1} parent=11 // pred_region
          %p141 = scmp.lt.s32.totalorder %s18, 0
          %s142 = scalar_select %p141, %s18, 0
          %s143 = smul.addr %s142, 30
          %s144 = smul.addr %s143, 8
          %s145 = scalar_lea.vmem %s2, %s144
        $region24: #{model_forward.1} parent=11 // pred_fallthru
          _
      $region12: #{model_forward.1} parent=5 // pred_fallthru
        _
      %p146 = scmp.lt.s32.totalorder %s9, 2
      // Predicated region
      $region25: #{model_forward.1} parent=5 // pred_check
        %p147 = pneg %p146
      $region26: #{model_forward.1} parent=5 // pred_check_branch
        %149 = sbr.rel (%p147) target = $region28
      $region27: #{model_forward.1} parent=5 // pred_region
        _
      $region28: #{model_forward.1} parent=5 // pred_fallthru
        _
      %p150 = scmp.le.s32.totalorder 1, %s9
      %p151 = scmp.lt.s32.totalorder %s9, 3
      %p152 = pnand %p150, %p151
      %p153 = pneg %p152
      // Predicated region
      $region29: #{model_forward.1} parent=5 // pred_check
        _
      $region30: #{model_forward.1} parent=5 // pred_check_branch
        %155 = sbr.rel (%p152) target = $region32
      $region31: #{model_forward.1} parent=5 // pred_region
        %s156 = ssub.s32 %s9, 1
        %p157 = pneg %p42
        %p158 = pneg %p39
        %p159 = pneg %p63
        %p160 = pneg %p60
        %p161 = scmp.lt.s32.totalorder %s18, 0
        %s162 = scalar_select %p161, %s18, 0
        %s163 = smul.addr %s162, 30
        %s164 = smul.addr %s163, 8
        %s165 = scalar_lea.vmem %s2, %s164
        %p166 = pneg %p89
        %p167 = pneg %p86
        %p168 = pneg %p117
        %p169 = pneg %p114
        %s170 = sand.u32 %s104, 1
        %s171 = sand.u32 %s104, 1
        %s172 = smul.addr %s171, 128
        %s173 = scalar_lea.vmem [#allocation2], %s172
        %p174 = scmp.lt.s32.totalorder %s18, 0
        %s175 = scalar_select %p174, %s18, 0
        %s176 = smul.addr %s175, 30
        %s177 = smul.addr %s176, 8
        %s178 = scalar_lea.vmem %s2, %s177
        %s179 = smul.u32 4, %s19
        %v180 = vld [vmem:[%s0] sm:$0xff]
        %v181 = vld [vmem:[%s0 + $0x8] sm:$0xff]
        %v182 = vld [vmem:[%s0 + $0x10] sm:$0xff]
        %v183 = vld [vmem:[%s0 + $0x18] sm:$0xff]
        %v184 = vld [vmem:[%s0 + $0x20] sm:$0xff]
        %v185 = vld [vmem:[%s0 + $0x28] sm:$0xff]
        %v186 = vld [vmem:[%s0 + $0x30] sm:$0xff]
        %v187 = vld [vmem:[%s0 + $0x38] sm:$0xff]
        %v188 = vld [vmem:[%s0 + $0x40] sm:$0xff]
        %v189 = vld [vmem:[%s0 + $0x48] sm:$0xff]
        %v190 = vld [vmem:[%s0 + $0x50] sm:$0xff]
        %v191 = vld [vmem:[%s0 + $0x58] sm:$0xff]
        %v192 = vld [vmem:[%s0 + $0x60] sm:$0xff]
        %v193 = vld [vmem:[%s0 + $0x68] sm:$0xff]
        %v194 = vld [vmem:[%s0 + $0x70] sm:$0xff]
        %v195 = vld [vmem:[%s0 + $0x78] sm:$0xff]
        %v196 = vld [vmem:[%s0 + $0x80] sm:$0xff]
        %v197 = vld [vmem:[%s0 + $0x88] sm:$0xff]
        %v198 = vld [vmem:[%s0 + $0x90] sm:$0xff]
        %v199 = vld [vmem:[%s0 + $0x98] sm:$0xff]
        %v200 = vld [vmem:[%s0 + $0xa0] sm:$0xff]
        %v201 = vld [vmem:[%s0 + $0xa8] sm:$0xff]
        %v202 = vld [vmem:[%s0 + $0xb0] sm:$0xff]
        %v203 = vld [vmem:[%s0 + $0xb8] sm:$0xff]
        %v204 = vld [vmem:[%s1] sm:$0xff]
        %v205 = vld [vmem:[%s1 + $0x8] sm:$0xff]
        %v206 = vld [vmem:[%s1 + $0x10] sm:$0xff]
        %v207 = vld [vmem:[%s1 + $0x18] sm:$0xff]
        %v208 = vld [vmem:[%s1 + $0x20] sm:$0xff]
        %v209 = vld [vmem:[%s1 + $0x28] sm:$0xff]
        %v210 = vld [vmem:[%s1 + $0x30] sm:$0xff]
        %v211 = vld [vmem:[%s1 + $0x38] sm:$0xff]
        %s212 = smul.u32 %s19, 32
        %s213 = scalar_lea.vmem %s178, %s212
        %v214 = vld [vmem:[%s213] sm:$0xff]
        %v215 = vld [vmem:[%s213 + $0x8] sm:$0xff]
        %v216 = vld [vmem:[%s213 + $0x50] sm:$0xff]
        %v217 = vld [vmem:[%s213 + $0x58] sm:$0xff]
        %v218 = vld [vmem:[%s213 + $0xa0] sm:$0xff]
        %v219 = vld [vmem:[%s213 + $0xa8] sm:$0xff]
        %222 = vrot.lane.b32.xlu0 %v214, 127
        %v223 = vpop.permute.xlu0 %222
        %224 = vrot.lane.b32.xlu0 %v215, 127
        %v225 = vpop.permute.xlu0 %224
        %230 = vrot.lane.b32.xlu0 %v216, 127
        %v231 = vpop.permute.xlu0 %230
        %232 = vrot.lane.b32.xlu0 %v217, 127
        %v233 = vpop.permute.xlu0 %232
        %238 = vrot.lane.b32.xlu0 %v218, 127
        %v239 = vpop.permute.xlu0 %238
        %240 = vrot.lane.b32.xlu0 %v219, 127
        %v241 = vpop.permute.xlu0 %240
        %244 = vrot.lane.b32.xlu0 %v214, 126
        %v245 = vpop.permute.xlu0 %244
        %246 = vrot.lane.b32.xlu0 %v215, 126
        %v247 = vpop.permute.xlu0 %246
        %250 = vrot.lane.b32.xlu0 %v216, 126
        %v251 = vpop.permute.xlu0 %250
        %252 = vrot.lane.b32.xlu0 %v217, 126
        %v253 = vpop.permute.xlu0 %252
        %256 = vrot.lane.b32.xlu0 %v218, 126
        %v257 = vpop.permute.xlu0 %256
        %258 = vrot.lane.b32.xlu0 %v219, 126
        %v259 = vpop.permute.xlu0 %258
        %262 = vrot.lane.b32.xlu0 %v214, 125
        %v263 = vpop.permute.xlu0 %262
        %264 = vrot.lane.b32.xlu0 %v215, 125
        %v265 = vpop.permute.xlu0 %264
        %268 = vrot.lane.b32.xlu0 %v216, 125
        %v269 = vpop.permute.xlu0 %268
        %270 = vrot.lane.b32.xlu0 %v217, 125
        %v271 = vpop.permute.xlu0 %270
        %274 = vrot.lane.b32.xlu0 %v218, 125
        %v275 = vpop.permute.xlu0 %274
        %276 = vrot.lane.b32.xlu0 %v219, 125
        %v277 = vpop.permute.xlu0 %276
        %280 = vrot.lane.b32.xlu0 %v214, 124
        %v281 = vpop.permute.xlu0 %280
        %282 = vrot.lane.b32.xlu0 %v215, 124
        %v283 = vpop.permute.xlu0 %282
        %286 = vrot.lane.b32.xlu0 %v216, 124
        %v287 = vpop.permute.xlu0 %286
        %288 = vrot.lane.b32.xlu0 %v217, 124
        %v289 = vpop.permute.xlu0 %288
        %292 = vrot.lane.b32.xlu0 %v218, 124
        %v293 = vpop.permute.xlu0 %292
        %294 = vrot.lane.b32.xlu0 %v219, 124
        %v295 = vpop.permute.xlu0 %294
        %298 = vrot.lane.b32.xlu0 %v214, 123
        %v299 = vpop.permute.xlu0 %298
        %300 = vrot.lane.b32.xlu0 %v215, 123
        %v301 = vpop.permute.xlu0 %300
        %304 = vrot.lane.b32.xlu0 %v216, 123
        %v305 = vpop.permute.xlu0 %304
        %306 = vrot.lane.b32.xlu0 %v217, 123
        %v307 = vpop.permute.xlu0 %306
        %308 = vrot.lane.b32.xlu0 %v218, 123
        %v309 = vpop.permute.xlu0 %308
        %310 = vrot.lane.b32.xlu0 %v219, 123
        %v311 = vpop.permute.xlu0 %310
        %312 = vrot.lane.b32.xlu0 %v223, 123
        %v313 = vpop.permute.xlu0 %312
        %314 = vrot.lane.b32.xlu0 %v225, 123
        %v315 = vpop.permute.xlu0 %314
        %316 = vrot.lane.b32.xlu0 %v231, 123
        %v317 = vpop.permute.xlu0 %316
        %318 = vrot.lane.b32.xlu0 %v233, 123
        %v319 = vpop.permute.xlu0 %318
        %320 = vrot.lane.b32.xlu0 %v239, 123
        %v321 = vpop.permute.xlu0 %320
        %322 = vrot.lane.b32.xlu0 %v241, 123
        %v323 = vpop.permute.xlu0 %322
        %324 = vrot.lane.b32.xlu0 %v245, 123
        %v325 = vpop.permute.xlu0 %324
        %326 = vrot.lane.b32.xlu0 %v247, 123
        %v327 = vpop.permute.xlu0 %326
        %328 = vrot.lane.b32.xlu0 %v251, 123
        %v329 = vpop.permute.xlu0 %328
        %330 = vrot.lane.b32.xlu0 %v253, 123
        %v331 = vpop.permute.xlu0 %330
        %332 = vrot.lane.b32.xlu0 %v257, 123
        %v333 = vpop.permute.xlu0 %332
        %334 = vrot.lane.b32.xlu0 %v259, 123
        %v335 = vpop.permute.xlu0 %334
        %353 = vset.pattern.permute.xlu0 0
        %354 = vperm.xlu0 %353, %v204
        %v355 = vpop.permute.xlu0 %354
        %358 = vset.pattern.permute.xlu0 0
        %359 = vperm.xlu0 %358, %v205
        %v360 = vpop.permute.xlu0 %359
        %363 = vset.pattern.permute.xlu0 0
        %364 = vperm.xlu0 %363, %v206
        %v365 = vpop.permute.xlu0 %364
        %368 = vset.pattern.permute.xlu0 0
        %369 = vperm.xlu0 %368, %v207
        %v370 = vpop.permute.xlu0 %369
        %373 = vset.pattern.permute.xlu0 0
        %374 = vperm.xlu0 %373, %v208
        %v375 = vpop.permute.xlu0 %374
        %378 = vset.pattern.permute.xlu0 0
        %379 = vperm.xlu0 %378, %v209
        %v380 = vpop.permute.xlu0 %379
        %383 = vset.pattern.permute.xlu0 0
        %384 = vperm.xlu0 %383, %v210
        %v385 = vpop.permute.xlu0 %384
        %388 = vset.pattern.permute.xlu0 0
        %389 = vperm.xlu0 %388, %v211
        %v390 = vpop.permute.xlu0 %389
        %392 = vmatpush.msra.mxu0 %v253
        %393 = vmatpush.msra.mxu0 %v251
        %394 = vmatpush.msra.mxu0 %v247
        %395 = vmatpush.msra.mxu0 %v245
        %396 = vmatpush.msra.mxu0 %v241
        %397 = vmatpush.msra.mxu0 %v239
        %398 = vmatpush.msra.mxu0 %v233
        %399 = vmatpush.msra.mxu0 %v231
        %400 = vmatpush.msra.mxu0 %v225
        %401 = vmatpush.msra.mxu0 %v223
        %402 = vmatpush.msra.mxu0 %v219
        %403 = vmatpush.msra.mxu0 %v218
        %404 = vmatpush.msra.mxu0 %v217
        %405 = vmatpush.msra.mxu0 %v216
        %406 = vmatpush.msra.mxu0 %v215
        %407 = vmatpush.msra.mxu0 %v214
        %408 = vmatmul.f32.gmra.mxu0 %v180
        %v409 = vpop.f32.mrf.mxu0
        %v410 = vadd.f32 %v355, %v409
        %411 = vmatmul.f32.gmra.mxu0 %v183
        %v412 = vpop.f32.mrf.mxu0
        %v413 = vadd.f32 %v360, %v412
        %414 = vmatmul.f32.gmra.mxu0 %v186
        %v415 = vpop.f32.mrf.mxu0
        %v416 = vadd.f32 %v365, %v415
        %417 = vmatmul.f32.gmra.mxu0 %v189
        %v418 = vpop.f32.mrf.mxu0
        %v419 = vadd.f32 %v370, %v418
        %420 = vmatmul.f32.gmra.mxu0 %v192
        %v421 = vpop.f32.mrf.mxu0
        %v422 = vadd.f32 %v375, %v421
        %423 = vmatmul.f32.gmra.mxu0 %v195
        %v424 = vpop.f32.mrf.mxu0
        %v425 = vadd.f32 %v380, %v424
        %426 = vmatmul.f32.gmra.mxu0 %v198
        %v427 = vpop.f32.mrf.mxu0
        %v428 = vadd.f32 %v385, %v427
        %429 = vmatmul.f32.gmra.mxu0 %v201
        %v430 = vpop.f32.mrf.mxu0
        %v431 = vadd.f32 %v390, %v430
        %432 = vdwg.mxu0
        %433 = vmatpush.msra.mxu0 %v301
        %434 = vmatpush.msra.mxu0 %v299
        %435 = vmatpush.msra.mxu0 %v295
        %436 = vmatpush.msra.mxu0 %v293
        %437 = vmatpush.msra.mxu0 %v289
        %438 = vmatpush.msra.mxu0 %v287
        %439 = vmatpush.msra.mxu0 %v283
        %440 = vmatpush.msra.mxu0 %v281
        %441 = vmatpush.msra.mxu0 %v277
        %442 = vmatpush.msra.mxu0 %v275
        %443 = vmatpush.msra.mxu0 %v271
        %444 = vmatpush.msra.mxu0 %v269
        %445 = vmatpush.msra.mxu0 %v265
        %446 = vmatpush.msra.mxu0 %v263
        %447 = vmatpush.msra.mxu0 %v259
        %448 = vmatpush.msra.mxu0 %v257
        %449 = vmatmul.f32.gmra.mxu0 %v181
        %v450 = vpop.f32.mrf.mxu0
        %v451 = vadd.f32 %v410, %v450
        %452 = vmatmul.f32.gmra.mxu0 %v184
        %v453 = vpop.f32.mrf.mxu0
        %v454 = vadd.f32 %v413, %v453
        %455 = vmatmul.f32.gmra.mxu0 %v187
        %v456 = vpop.f32.mrf.mxu0
        %v457 = vadd.f32 %v416, %v456
        %458 = vmatmul.f32.gmra.mxu0 %v190
        %v459 = vpop.f32.mrf.mxu0
        %v460 = vadd.f32 %v419, %v459
        %461 = vmatmul.f32.gmra.mxu0 %v193
        %v462 = vpop.f32.mrf.mxu0
        %v463 = vadd.f32 %v422, %v462
        %464 = vmatmul.f32.gmra.mxu0 %v196
        %v465 = vpop.f32.mrf.mxu0
        %v466 = vadd.f32 %v425, %v465
        %467 = vmatmul.f32.gmra.mxu0 %v199
        %v468 = vpop.f32.mrf.mxu0
        %v469 = vadd.f32 %v428, %v468
        %470 = vmatmul.f32.gmra.mxu0 %v202
        %v471 = vpop.f32.mrf.mxu0
        %v472 = vadd.f32 %v431, %v471
        %473 = vdwg.mxu0
        %474 = vmatpush.msra.mxu0 %v335
        %475 = vmatpush.msra.mxu0 %v333
        %476 = vmatpush.msra.mxu0 %v331
        %477 = vmatpush.msra.mxu0 %v329
        %478 = vmatpush.msra.mxu0 %v327
        %479 = vmatpush.msra.mxu0 %v325
        %480 = vmatpush.msra.mxu0 %v323
        %481 = vmatpush.msra.mxu0 %v321
        %482 = vmatpush.msra.mxu0 %v319
        %483 = vmatpush.msra.mxu0 %v317
        %484 = vmatpush.msra.mxu0 %v315
        %485 = vmatpush.msra.mxu0 %v313
        %486 = vmatpush.msra.mxu0 %v311
        %487 = vmatpush.msra.mxu0 %v309
        %488 = vmatpush.msra.mxu0 %v307
        %489 = vmatpush.msra.mxu0 %v305
        %490 = vmatmul.f32.gmra.mxu0 %v182
        %v491 = vpop.f32.mrf.mxu0
        %v492 = vadd.f32 %v451, %v491
        %493 = vmatmul.f32.gmra.mxu0 %v185
        %v494 = vpop.f32.mrf.mxu0
        %v495 = vadd.f32 %v454, %v494
        %496 = vmatmul.f32.gmra.mxu0 %v188
        %v497 = vpop.f32.mrf.mxu0
        %v498 = vadd.f32 %v457, %v497
        %499 = vmatmul.f32.gmra.mxu0 %v191
        %v500 = vpop.f32.mrf.mxu0
        %v501 = vadd.f32 %v460, %v500
        %502 = vmatmul.f32.gmra.mxu0 %v194
        %v503 = vpop.f32.mrf.mxu0
        %v504 = vadd.f32 %v463, %v503
        %505 = vmatmul.f32.gmra.mxu0 %v197
        %v506 = vpop.f32.mrf.mxu0
        %v507 = vadd.f32 %v466, %v506
        %508 = vmatmul.f32.gmra.mxu0 %v200
        %v509 = vpop.f32.mrf.mxu0
        %v510 = vadd.f32 %v469, %v509
        %511 = vmatmul.f32.gmra.mxu0 %v203
        %v512 = vpop.f32.mrf.mxu0
        %v513 = vadd.f32 %v472, %v512
        %514 = vdwg.mxu0
        %v515 = vmul.f32 %v492, %v504
        %v516 = vmul.f32 %v495, %v507
        %v517 = vmul.f32 %v498, %v510
        %v518 = vmul.f32 %v501, %v513
        %vm519 = vcmask 523264
        %520 = vst.msk [vmem:[%s173] sm:$0xff] %vm519, %v515
        %s521 = scalar_lea.vmem %s173, 32 [#allocation2]
        %522 = vst.msk [vmem:[%s521] sm:$0xff] %vm519, %v516
        %s523 = scalar_lea.vmem %s173, 64 [#allocation2]
        %524 = vst.msk [vmem:[%s523] sm:$0xff] %vm519, %v517
        %s525 = scalar_lea.vmem %s173, 96 [#allocation2]
        %526 = vst.msk [vmem:[%s525] sm:$0xff] %vm519, %v518
        %s527 = sadd.s32 %s212, 8
        %s528 = scalar_lea.vmem %s178, %s527
        %v529 = vld [vmem:[%s528] sm:$0xff]
        %v530 = vld [vmem:[%s528 + $0x8] sm:$0xff]
        %v531 = vld [vmem:[%s528 + $0x50] sm:$0xff]
        %v532 = vld [vmem:[%s528 + $0x58] sm:$0xff]
        %v533 = vld [vmem:[%s528 + $0xa0] sm:$0xff]
        %v534 = vld [vmem:[%s528 + $0xa8] sm:$0xff]
        %537 = vrot.lane.b32.xlu0 %v529, 127
        %v538 = vpop.permute.xlu0 %537
        %539 = vrot.lane.b32.xlu0 %v530, 127
        %v540 = vpop.permute.xlu0 %539
        %545 = vrot.lane.b32.xlu0 %v531, 127
        %v546 = vpop.permute.xlu0 %545
        %547 = vrot.lane.b32.xlu0 %v532, 127
        %v548 = vpop.permute.xlu0 %547
        %553 = vrot.lane.b32.xlu0 %v533, 127
        %v554 = vpop.permute.xlu0 %553
        %555 = vrot.lane.b32.xlu0 %v534, 127
        %v556 = vpop.permute.xlu0 %555
        %559 = vrot.lane.b32.xlu0 %v529, 126
        %v560 = vpop.permute.xlu0 %559
        %561 = vrot.lane.b32.xlu0 %v530, 126
        %v562 = vpop.permute.xlu0 %561
        %565 = vrot.lane.b32.xlu0 %v531, 126
        %v566 = vpop.permute.xlu0 %565
        %567 = vrot.lane.b32.xlu0 %v532, 126
        %v568 = vpop.permute.xlu0 %567
        %571 = vrot.lane.b32.xlu0 %v533, 126
        %v572 = vpop.permute.xlu0 %571
        %573 = vrot.lane.b32.xlu0 %v534, 126
        %v574 = vpop.permute.xlu0 %573
        %577 = vrot.lane.b32.xlu0 %v529, 125
        %v578 = vpop.permute.xlu0 %577
        %579 = vrot.lane.b32.xlu0 %v530, 125
        %v580 = vpop.permute.xlu0 %579
        %583 = vrot.lane.b32.xlu0 %v531, 125
        %v584 = vpop.permute.xlu0 %583
        %585 = vrot.lane.b32.xlu0 %v532, 125
        %v586 = vpop.permute.xlu0 %585
        %589 = vrot.lane.b32.xlu0 %v533, 125
        %v590 = vpop.permute.xlu0 %589
        %591 = vrot.lane.b32.xlu0 %v534, 125
        %v592 = vpop.permute.xlu0 %591
        %595 = vrot.lane.b32.xlu0 %v529, 124
        %v596 = vpop.permute.xlu0 %595
        %597 = vrot.lane.b32.xlu0 %v530, 124
        %v598 = vpop.permute.xlu0 %597
        %601 = vrot.lane.b32.xlu0 %v531, 124
        %v602 = vpop.permute.xlu0 %601
        %603 = vrot.lane.b32.xlu0 %v532, 124
        %v604 = vpop.permute.xlu0 %603
        %607 = vrot.lane.b32.xlu0 %v533, 124
        %v608 = vpop.permute.xlu0 %607
        %609 = vrot.lane.b32.xlu0 %v534, 124
        %v610 = vpop.permute.xlu0 %609
        %613 = vrot.lane.b32.xlu0 %v529, 123
        %v614 = vpop.permute.xlu0 %613
        %615 = vrot.lane.b32.xlu0 %v530, 123
        %v616 = vpop.permute.xlu0 %615
        %619 = vrot.lane.b32.xlu0 %v531, 123
        %v620 = vpop.permute.xlu0 %619
        %621 = vrot.lane.b32.xlu0 %v532, 123
        %v622 = vpop.permute.xlu0 %621
        %623 = vrot.lane.b32.xlu0 %v533, 123
        %v624 = vpop.permute.xlu0 %623
        %625 = vrot.lane.b32.xlu0 %v534, 123
        %v626 = vpop.permute.xlu0 %625
        %627 = vrot.lane.b32.xlu0 %v538, 123
        %v628 = vpop.permute.xlu0 %627
        %629 = vrot.lane.b32.xlu0 %v540, 123
        %v630 = vpop.permute.xlu0 %629
        %631 = vrot.lane.b32.xlu0 %v546, 123
        %v632 = vpop.permute.xlu0 %631
        %633 = vrot.lane.b32.xlu0 %v548, 123
        %v634 = vpop.permute.xlu0 %633
        %635 = vrot.lane.b32.xlu0 %v554, 123
        %v636 = vpop.permute.xlu0 %635
        %637 = vrot.lane.b32.xlu0 %v556, 123
        %v638 = vpop.permute.xlu0 %637
        %639 = vrot.lane.b32.xlu0 %v560, 123
        %v640 = vpop.permute.xlu0 %639
        %641 = vrot.lane.b32.xlu0 %v562, 123
        %v642 = vpop.permute.xlu0 %641
        %643 = vrot.lane.b32.xlu0 %v566, 123
        %v644 = vpop.permute.xlu0 %643
        %645 = vrot.lane.b32.xlu0 %v568, 123
        %v646 = vpop.permute.xlu0 %645
        %647 = vrot.lane.b32.xlu0 %v572, 123
        %v648 = vpop.permute.xlu0 %647
        %649 = vrot.lane.b32.xlu0 %v574, 123
        %v650 = vpop.permute.xlu0 %649
        %667 = vmatpush.msra.mxu0 %v568
        %668 = vmatpush.msra.mxu0 %v566
        %669 = vmatpush.msra.mxu0 %v562
        %670 = vmatpush.msra.mxu0 %v560
        %671 = vmatpush.msra.mxu0 %v556
        %672 = vmatpush.msra.mxu0 %v554
        %673 = vmatpush.msra.mxu0 %v548
        %674 = vmatpush.msra.mxu0 %v546
        %675 = vmatpush.msra.mxu0 %v540
        %676 = vmatpush.msra.mxu0 %v538
        %677 = vmatpush.msra.mxu0 %v534
        %678 = vmatpush.msra.mxu0 %v533
        %679 = vmatpush.msra.mxu0 %v532
        %680 = vmatpush.msra.mxu0 %v531
        %681 = vmatpush.msra.mxu0 %v530
        %682 = vmatpush.msra.mxu0 %v529
        %683 = vmatmul.f32.gmra.mxu0 %v180
        %v684 = vpop.f32.mrf.mxu0
        %v685 = vadd.f32 %v355, %v684
        %686 = vmatmul.f32.gmra.mxu0 %v183
        %v687 = vpop.f32.mrf.mxu0
        %v688 = vadd.f32 %v360, %v687
        %689 = vmatmul.f32.gmra.mxu0 %v186
        %v690 = vpop.f32.mrf.mxu0
        %v691 = vadd.f32 %v365, %v690
        %692 = vmatmul.f32.gmra.mxu0 %v189
        %v693 = vpop.f32.mrf.mxu0
        %v694 = vadd.f32 %v370, %v693
        %695 = vmatmul.f32.gmra.mxu0 %v192
        %v696 = vpop.f32.mrf.mxu0
        %v697 = vadd.f32 %v375, %v696
        %698 = vmatmul.f32.gmra.mxu0 %v195
        %v699 = vpop.f32.mrf.mxu0
        %v700 = vadd.f32 %v380, %v699
        %701 = vmatmul.f32.gmra.mxu0 %v198
        %v702 = vpop.f32.mrf.mxu0
        %v703 = vadd.f32 %v385, %v702
        %704 = vmatmul.f32.gmra.mxu0 %v201
        %v705 = vpop.f32.mrf.mxu0
        %v706 = vadd.f32 %v390, %v705
        %707 = vdwg.mxu0
        %708 = vmatpush.msra.mxu0 %v616
        %709 = vmatpush.msra.mxu0 %v614
        %710 = vmatpush.msra.mxu0 %v610
        %711 = vmatpush.msra.mxu0 %v608
        %712 = vmatpush.msra.mxu0 %v604
        %713 = vmatpush.msra.mxu0 %v602
        %714 = vmatpush.msra.mxu0 %v598
        %715 = vmatpush.msra.mxu0 %v596
        %716 = vmatpush.msra.mxu0 %v592
        %717 = vmatpush.msra.mxu0 %v590
        %718 = vmatpush.msra.mxu0 %v586
        %719 = vmatpush.msra.mxu0 %v584
        %720 = vmatpush.msra.mxu0 %v580
        %721 = vmatpush.msra.mxu0 %v578
        %722 = vmatpush.msra.mxu0 %v574
        %723 = vmatpush.msra.mxu0 %v572
        %724 = vmatmul.f32.gmra.mxu0 %v181
        %v725 = vpop.f32.mrf.mxu0
        %v726 = vadd.f32 %v685, %v725
        %727 = vmatmul.f32.gmra.mxu0 %v184
        %v728 = vpop.f32.mrf.mxu0
        %v729 = vadd.f32 %v688, %v728
        %730 = vmatmul.f32.gmra.mxu0 %v187
        %v731 = vpop.f32.mrf.mxu0
        %v732 = vadd.f32 %v691, %v731
        %733 = vmatmul.f32.gmra.mxu0 %v190
        %v734 = vpop.f32.mrf.mxu0
        %v735 = vadd.f32 %v694, %v734
        %736 = vmatmul.f32.gmra.mxu0 %v193
        %v737 = vpop.f32.mrf.mxu0
        %v738 = vadd.f32 %v697, %v737
        %739 = vmatmul.f32.gmra.mxu0 %v196
        %v740 = vpop.f32.mrf.mxu0
        %v741 = vadd.f32 %v700, %v740
        %742 = vmatmul.f32.gmra.mxu0 %v199
        %v743 = vpop.f32.mrf.mxu0
        %v744 = vadd.f32 %v703, %v743
        %745 = vmatmul.f32.gmra.mxu0 %v202
        %v746 = vpop.f32.mrf.mxu0
        %v747 = vadd.f32 %v706, %v746
        %748 = vdwg.mxu0
        %749 = vmatpush.msra.mxu0 %v650
        %750 = vmatpush.msra.mxu0 %v648
        %751 = vmatpush.msra.mxu0 %v646
        %752 = vmatpush.msra.mxu0 %v644
        %753 = vmatpush.msra.mxu0 %v642
        %754 = vmatpush.msra.mxu0 %v640
        %755 = vmatpush.msra.mxu0 %v638
        %756 = vmatpush.msra.mxu0 %v636
        %757 = vmatpush.msra.mxu0 %v634
        %758 = vmatpush.msra.mxu0 %v632
        %759 = vmatpush.msra.mxu0 %v630
        %760 = vmatpush.msra.mxu0 %v628
        %761 = vmatpush.msra.mxu0 %v626
        %762 = vmatpush.msra.mxu0 %v624
        %763 = vmatpush.msra.mxu0 %v622
        %764 = vmatpush.msra.mxu0 %v620
        %765 = vmatmul.f32.gmra.mxu0 %v182
        %v766 = vpop.f32.mrf.mxu0
        %v767 = vadd.f32 %v726, %v766
        %768 = vmatmul.f32.gmra.mxu0 %v185
        %v769 = vpop.f32.mrf.mxu0
        %v770 = vadd.f32 %v729, %v769
        %771 = vmatmul.f32.gmra.mxu0 %v188
        %v772 = vpop.f32.mrf.mxu0
        %v773 = vadd.f32 %v732, %v772
        %774 = vmatmul.f32.gmra.mxu0 %v191
        %v775 = vpop.f32.mrf.mxu0
        %v776 = vadd.f32 %v735, %v775
        %777 = vmatmul.f32.gmra.mxu0 %v194
        %v778 = vpop.f32.mrf.mxu0
        %v779 = vadd.f32 %v738, %v778
        %780 = vmatmul.f32.gmra.mxu0 %v197
        %v781 = vpop.f32.mrf.mxu0
        %v782 = vadd.f32 %v741, %v781
        %783 = vmatmul.f32.gmra.mxu0 %v200
        %v784 = vpop.f32.mrf.mxu0
        %v785 = vadd.f32 %v744, %v784
        %786 = vmatmul.f32.gmra.mxu0 %v203
        %v787 = vpop.f32.mrf.mxu0
        %v788 = vadd.f32 %v747, %v787
        %789 = vdwg.mxu0
        %v790 = vmul.f32 %v767, %v779
        %v791 = vmul.f32 %v770, %v782
        %v792 = vmul.f32 %v773, %v785
        %v793 = vmul.f32 %v776, %v788
        %794 = vst.msk [vmem:[%s173 + $0x8] sm:$0xff] %vm519, %v790
        %795 = vst.msk [vmem:[%s521 + $0x8] sm:$0xff] %vm519, %v791
        %796 = vst.msk [vmem:[%s523 + $0x8] sm:$0xff] %vm519, %v792
        %797 = vst.msk [vmem:[%s525 + $0x8] sm:$0xff] %vm519, %v793
        %s798 = sadd.s32 %s212, 16
        %s799 = scalar_lea.vmem %s178, %s798
        %v800 = vld [vmem:[%s799] sm:$0xff]
        %v801 = vld [vmem:[%s799 + $0x8] sm:$0xff]
        %v802 = vld [vmem:[%s799 + $0x50] sm:$0xff]
        %v803 = vld [vmem:[%s799 + $0x58] sm:$0xff]
        %v804 = vld [vmem:[%s799 + $0xa0] sm:$0xff]
        %v805 = vld [vmem:[%s799 + $0xa8] sm:$0xff]
        %808 = vrot.lane.b32.xlu0 %v800, 127
        %v809 = vpop.permute.xlu0 %808
        %810 = vrot.lane.b32.xlu0 %v801, 127
        %v811 = vpop.permute.xlu0 %810
        %816 = vrot.lane.b32.xlu0 %v802, 127
        %v817 = vpop.permute.xlu0 %816
        %818 = vrot.lane.b32.xlu0 %v803, 127
        %v819 = vpop.permute.xlu0 %818
        %824 = vrot.lane.b32.xlu0 %v804, 127
        %v825 = vpop.permute.xlu0 %824
        %826 = vrot.lane.b32.xlu0 %v805, 127
        %v827 = vpop.permute.xlu0 %826
        %830 = vrot.lane.b32.xlu0 %v800, 126
        %v831 = vpop.permute.xlu0 %830
        %832 = vrot.lane.b32.xlu0 %v801, 126
        %v833 = vpop.permute.xlu0 %832
        %836 = vrot.lane.b32.xlu0 %v802, 126
        %v837 = vpop.permute.xlu0 %836
        %838 = vrot.lane.b32.xlu0 %v803, 126
        %v839 = vpop.permute.xlu0 %838
        %842 = vrot.lane.b32.xlu0 %v804, 126
        %v843 = vpop.permute.xlu0 %842
        %844 = vrot.lane.b32.xlu0 %v805, 126
        %v845 = vpop.permute.xlu0 %844
        %848 = vrot.lane.b32.xlu0 %v800, 125
        %v849 = vpop.permute.xlu0 %848
        %850 = vrot.lane.b32.xlu0 %v801, 125
        %v851 = vpop.permute.xlu0 %850
        %854 = vrot.lane.b32.xlu0 %v802, 125
        %v855 = vpop.permute.xlu0 %854
        %856 = vrot.lane.b32.xlu0 %v803, 125
        %v857 = vpop.permute.xlu0 %856
        %860 = vrot.lane.b32.xlu0 %v804, 125
        %v861 = vpop.permute.xlu0 %860
        %862 = vrot.lane.b32.xlu0 %v805, 125
        %v863 = vpop.permute.xlu0 %862
        %866 = vrot.lane.b32.xlu0 %v800, 124
        %v867 = vpop.permute.xlu0 %866
        %868 = vrot.lane.b32.xlu0 %v801, 124
        %v869 = vpop.permute.xlu0 %868
        %872 = vrot.lane.b32.xlu0 %v802, 124
        %v873 = vpop.permute.xlu0 %872
        %874 = vrot.lane.b32.xlu0 %v803, 124
        %v875 = vpop.permute.xlu0 %874
        %878 = vrot.lane.b32.xlu0 %v804, 124
        %v879 = vpop.permute.xlu0 %878
        %880 = vrot.lane.b32.xlu0 %v805, 124
        %v881 = vpop.permute.xlu0 %880
        %884 = vrot.lane.b32.xlu0 %v800, 123
        %v885 = vpop.permute.xlu0 %884
        %886 = vrot.lane.b32.xlu0 %v801, 123
        %v887 = vpop.permute.xlu0 %886
        %890 = vrot.lane.b32.xlu0 %v802, 123
        %v891 = vpop.permute.xlu0 %890
        %892 = vrot.lane.b32.xlu0 %v803, 123
        %v893 = vpop.permute.xlu0 %892
        %894 = vrot.lane.b32.xlu0 %v804, 123
        %v895 = vpop.permute.xlu0 %894
        %896 = vrot.lane.b32.xlu0 %v805, 123
        %v897 = vpop.permute.xlu0 %896
        %898 = vrot.lane.b32.xlu0 %v809, 123
        %v899 = vpop.permute.xlu0 %898
        %900 = vrot.lane.b32.xlu0 %v811, 123
        %v901 = vpop.permute.xlu0 %900
        %902 = vrot.lane.b32.xlu0 %v817, 123
        %v903 = vpop.permute.xlu0 %902
        %904 = vrot.lane.b32.xlu0 %v819, 123
        %v905 = vpop.permute.xlu0 %904
        %906 = vrot.lane.b32.xlu0 %v825, 123
        %v907 = vpop.permute.xlu0 %906
        %908 = vrot.lane.b32.xlu0 %v827, 123
        %v909 = vpop.permute.xlu0 %908
        %910 = vrot.lane.b32.xlu0 %v831, 123
        %v911 = vpop.permute.xlu0 %910
        %912 = vrot.lane.b32.xlu0 %v833, 123
        %v913 = vpop.permute.xlu0 %912
        %914 = vrot.lane.b32.xlu0 %v837, 123
        %v915 = vpop.permute.xlu0 %914
        %916 = vrot.lane.b32.xlu0 %v839, 123
        %v917 = vpop.permute.xlu0 %916
        %918 = vrot.lane.b32.xlu0 %v843, 123
        %v919 = vpop.permute.xlu0 %918
        %920 = vrot.lane.b32.xlu0 %v845, 123
        %v921 = vpop.permute.xlu0 %920
        %938 = vmatpush.msra.mxu0 %v839
        %939 = vmatpush.msra.mxu0 %v837
        %940 = vmatpush.msra.mxu0 %v833
        %941 = vmatpush.msra.mxu0 %v831
        %942 = vmatpush.msra.mxu0 %v827
        %943 = vmatpush.msra.mxu0 %v825
        %944 = vmatpush.msra.mxu0 %v819
        %945 = vmatpush.msra.mxu0 %v817
        %946 = vmatpush.msra.mxu0 %v811
        %947 = vmatpush.msra.mxu0 %v809
        %948 = vmatpush.msra.mxu0 %v805
        %949 = vmatpush.msra.mxu0 %v804
        %950 = vmatpush.msra.mxu0 %v803
        %951 = vmatpush.msra.mxu0 %v802
        %952 = vmatpush.msra.mxu0 %v801
        %953 = vmatpush.msra.mxu0 %v800
        %954 = vmatmul.f32.gmra.mxu0 %v180
        %v955 = vpop.f32.mrf.mxu0
        %v956 = vadd.f32 %v355, %v955
        %957 = vmatmul.f32.gmra.mxu0 %v183
        %v958 = vpop.f32.mrf.mxu0
        %v959 = vadd.f32 %v360, %v958
        %960 = vmatmul.f32.gmra.mxu0 %v186
        %v961 = vpop.f32.mrf.mxu0
        %v962 = vadd.f32 %v365, %v961
        %963 = vmatmul.f32.gmra.mxu0 %v189
        %v964 = vpop.f32.mrf.mxu0
        %v965 = vadd.f32 %v370, %v964
        %966 = vmatmul.f32.gmra.mxu0 %v192
        %v967 = vpop.f32.mrf.mxu0
        %v968 = vadd.f32 %v375, %v967
        %969 = vmatmul.f32.gmra.mxu0 %v195
        %v970 = vpop.f32.mrf.mxu0
        %v971 = vadd.f32 %v380, %v970
        %972 = vmatmul.f32.gmra.mxu0 %v198
        %v973 = vpop.f32.mrf.mxu0
        %v974 = vadd.f32 %v385, %v973
        %975 = vmatmul.f32.gmra.mxu0 %v201
        %v976 = vpop.f32.mrf.mxu0
        %v977 = vadd.f32 %v390, %v976
        %978 = vdwg.mxu0
        %979 = vmatpush.msra.mxu0 %v887
        %980 = vmatpush.msra.mxu0 %v885
        %981 = vmatpush.msra.mxu0 %v881
        %982 = vmatpush.msra.mxu0 %v879
        %983 = vmatpush.msra.mxu0 %v875
        %984 = vmatpush.msra.mxu0 %v873
        %985 = vmatpush.msra.mxu0 %v869
        %986 = vmatpush.msra.mxu0 %v867
        %987 = vmatpush.msra.mxu0 %v863
        %988 = vmatpush.msra.mxu0 %v861
        %989 = vmatpush.msra.mxu0 %v857
        %990 = vmatpush.msra.mxu0 %v855
        %991 = vmatpush.msra.mxu0 %v851
        %992 = vmatpush.msra.mxu0 %v849
        %993 = vmatpush.msra.mxu0 %v845
        %994 = vmatpush.msra.mxu0 %v843
        %995 = vmatmul.f32.gmra.mxu0 %v181
        %v996 = vpop.f32.mrf.mxu0
        %v997 = vadd.f32 %v956, %v996
        %998 = vmatmul.f32.gmra.mxu0 %v184
        %v999 = vpop.f32.mrf.mxu0
        %v1000 = vadd.f32 %v959, %v999
        %1001 = vmatmul.f32.gmra.mxu0 %v187
        %v1002 = vpop.f32.mrf.mxu0
        %v1003 = vadd.f32 %v962, %v1002
        %1004 = vmatmul.f32.gmra.mxu0 %v190
        %v1005 = vpop.f32.mrf.mxu0
        %v1006 = vadd.f32 %v965, %v1005
        %1007 = vmatmul.f32.gmra.mxu0 %v193
        %v1008 = vpop.f32.mrf.mxu0
        %v1009 = vadd.f32 %v968, %v1008
        %1010 = vmatmul.f32.gmra.mxu0 %v196
        %v1011 = vpop.f32.mrf.mxu0
        %v1012 = vadd.f32 %v971, %v1011
        %1013 = vmatmul.f32.gmra.mxu0 %v199
        %v1014 = vpop.f32.mrf.mxu0
        %v1015 = vadd.f32 %v974, %v1014
        %1016 = vmatmul.f32.gmra.mxu0 %v202
        %v1017 = vpop.f32.mrf.mxu0
        %v1018 = vadd.f32 %v977, %v1017
        %1019 = vdwg.mxu0
        %1020 = vmatpush.msra.mxu0 %v921
        %1021 = vmatpush.msra.mxu0 %v919
        %1022 = vmatpush.msra.mxu0 %v917
        %1023 = vmatpush.msra.mxu0 %v915
        %1024 = vmatpush.msra.mxu0 %v913
        %1025 = vmatpush.msra.mxu0 %v911
        %1026 = vmatpush.msra.mxu0 %v909
        %1027 = vmatpush.msra.mxu0 %v907
        %1028 = vmatpush.msra.mxu0 %v905
        %1029 = vmatpush.msra.mxu0 %v903
        %1030 = vmatpush.msra.mxu0 %v901
        %1031 = vmatpush.msra.mxu0 %v899
        %1032 = vmatpush.msra.mxu0 %v897
        %1033 = vmatpush.msra.mxu0 %v895
        %1034 = vmatpush.msra.mxu0 %v893
        %1035 = vmatpush.msra.mxu0 %v891
        %1036 = vmatmul.f32.gmra.mxu0 %v182
        %v1037 = vpop.f32.mrf.mxu0
        %v1038 = vadd.f32 %v997, %v1037
        %1039 = vmatmul.f32.gmra.mxu0 %v185
        %v1040 = vpop.f32.mrf.mxu0
        %v1041 = vadd.f32 %v1000, %v1040
        %1042 = vmatmul.f32.gmra.mxu0 %v188
        %v1043 = vpop.f32.mrf.mxu0
        %v1044 = vadd.f32 %v1003, %v1043
        %1045 = vmatmul.f32.gmra.mxu0 %v191
        %v1046 = vpop.f32.mrf.mxu0
        %v1047 = vadd.f32 %v1006, %v1046
        %1048 = vmatmul.f32.gmra.mxu0 %v194
        %v1049 = vpop.f32.mrf.mxu0
        %v1050 = vadd.f32 %v1009, %v1049
        %1051 = vmatmul.f32.gmra.mxu0 %v197
        %v1052 = vpop.f32.mrf.mxu0
        %v1053 = vadd.f32 %v1012, %v1052
        %1054 = vmatmul.f32.gmra.mxu0 %v200
        %v1055 = vpop.f32.mrf.mxu0
        %v1056 = vadd.f32 %v1015, %v1055
        %1057 = vmatmul.f32.gmra.mxu0 %v203
        %v1058 = vpop.f32.mrf.mxu0
        %v1059 = vadd.f32 %v1018, %v1058
        %1060 = vdwg.mxu0
        %v1061 = vmul.f32 %v1038, %v1050
        %v1062 = vmul.f32 %v1041, %v1053
        %v1063 = vmul.f32 %v1044, %v1056
        %v1064 = vmul.f32 %v1047, %v1059
        %1065 = vst.msk [vmem:[%s173 + $0x10] sm:$0xff] %vm519, %v1061
        %1066 = vst.msk [vmem:[%s521 + $0x10] sm:$0xff] %vm519, %v1062
        %1067 = vst.msk [vmem:[%s523 + $0x10] sm:$0xff] %vm519, %v1063
        %1068 = vst.msk [vmem:[%s525 + $0x10] sm:$0xff] %vm519, %v1064
        %s1069 = sadd.s32 %s212, 24
        %s1070 = scalar_lea.vmem %s178, %s1069
        %v1071 = vld [vmem:[%s1070] sm:$0xff]
        %v1072 = vld [vmem:[%s1070 + $0x8] sm:$0xff]
        %v1073 = vld [vmem:[%s1070 + $0x50] sm:$0xff]
        %v1074 = vld [vmem:[%s1070 + $0x58] sm:$0xff]
        %v1075 = vld [vmem:[%s1070 + $0xa0] sm:$0xff]
        %v1076 = vld [vmem:[%s1070 + $0xa8] sm:$0xff]
        %1079 = vrot.lane.b32.xlu0 %v1071, 127
        %v1080 = vpop.permute.xlu0 %1079
        %1081 = vrot.lane.b32.xlu0 %v1072, 127
        %v1082 = vpop.permute.xlu0 %1081
        %1087 = vrot.lane.b32.xlu0 %v1073, 127
        %v1088 = vpop.permute.xlu0 %1087
        %1089 = vrot.lane.b32.xlu0 %v1074, 127
        %v1090 = vpop.permute.xlu0 %1089
        %1095 = vrot.lane.b32.xlu0 %v1075, 127
        %v1096 = vpop.permute.xlu0 %1095
        %1097 = vrot.lane.b32.xlu0 %v1076, 127
        %v1098 = vpop.permute.xlu0 %1097
        %1101 = vrot.lane.b32.xlu0 %v1071, 126
        %v1102 = vpop.permute.xlu0 %1101
        %1103 = vrot.lane.b32.xlu0 %v1072, 126
        %v1104 = vpop.permute.xlu0 %1103
        %1107 = vrot.lane.b32.xlu0 %v1073, 126
        %v1108 = vpop.permute.xlu0 %1107
        %1109 = vrot.lane.b32.xlu0 %v1074, 126
        %v1110 = vpop.permute.xlu0 %1109
        %1113 = vrot.lane.b32.xlu0 %v1075, 126
        %v1114 = vpop.permute.xlu0 %1113
        %1115 = vrot.lane.b32.xlu0 %v1076, 126
        %v1116 = vpop.permute.xlu0 %1115
        %1119 = vrot.lane.b32.xlu0 %v1071, 125
        %v1120 = vpop.permute.xlu0 %1119
        %1121 = vrot.lane.b32.xlu0 %v1072, 125
        %v1122 = vpop.permute.xlu0 %1121
        %1125 = vrot.lane.b32.xlu0 %v1073, 125
        %v1126 = vpop.permute.xlu0 %1125
        %1127 = vrot.lane.b32.xlu0 %v1074, 125
        %v1128 = vpop.permute.xlu0 %1127
        %1131 = vrot.lane.b32.xlu0 %v1075, 125
        %v1132 = vpop.permute.xlu0 %1131
        %1133 = vrot.lane.b32.xlu0 %v1076, 125
        %v1134 = vpop.permute.xlu0 %1133
        %1137 = vrot.lane.b32.xlu0 %v1071, 124
        %v1138 = vpop.permute.xlu0 %1137
        %1139 = vrot.lane.b32.xlu0 %v1072, 124
        %v1140 = vpop.permute.xlu0 %1139
        %1143 = vrot.lane.b32.xlu0 %v1073, 124
        %v1144 = vpop.permute.xlu0 %1143
        %1145 = vrot.lane.b32.xlu0 %v1074, 124
        %v1146 = vpop.permute.xlu0 %1145
        %1149 = vrot.lane.b32.xlu0 %v1075, 124
        %v1150 = vpop.permute.xlu0 %1149
        %1151 = vrot.lane.b32.xlu0 %v1076, 124
        %v1152 = vpop.permute.xlu0 %1151
        %1155 = vrot.lane.b32.xlu0 %v1071, 123
        %v1156 = vpop.permute.xlu0 %1155
        %1157 = vrot.lane.b32.xlu0 %v1072, 123
        %v1158 = vpop.permute.xlu0 %1157
        %1161 = vrot.lane.b32.xlu0 %v1073, 123
        %v1162 = vpop.permute.xlu0 %1161
        %1163 = vrot.lane.b32.xlu0 %v1074, 123
        %v1164 = vpop.permute.xlu0 %1163
        %1165 = vrot.lane.b32.xlu0 %v1075, 123
        %v1166 = vpop.permute.xlu0 %1165
        %1167 = vrot.lane.b32.xlu0 %v1076, 123
        %v1168 = vpop.permute.xlu0 %1167
        %1169 = vrot.lane.b32.xlu0 %v1080, 123
        %v1170 = vpop.permute.xlu0 %1169
        %1171 = vrot.lane.b32.xlu0 %v1082, 123
        %v1172 = vpop.permute.xlu0 %1171
        %1173 = vrot.lane.b32.xlu0 %v1088, 123
        %v1174 = vpop.permute.xlu0 %1173
        %1175 = vrot.lane.b32.xlu0 %v1090, 123
        %v1176 = vpop.permute.xlu0 %1175
        %1177 = vrot.lane.b32.xlu0 %v1096, 123
        %v1178 = vpop.permute.xlu0 %1177
        %1179 = vrot.lane.b32.xlu0 %v1098, 123
        %v1180 = vpop.permute.xlu0 %1179
        %1181 = vrot.lane.b32.xlu0 %v1102, 123
        %v1182 = vpop.permute.xlu0 %1181
        %1183 = vrot.lane.b32.xlu0 %v1104, 123
        %v1184 = vpop.permute.xlu0 %1183
        %1185 = vrot.lane.b32.xlu0 %v1108, 123
        %v1186 = vpop.permute.xlu0 %1185
        %1187 = vrot.lane.b32.xlu0 %v1110, 123
        %v1188 = vpop.permute.xlu0 %1187
        %1189 = vrot.lane.b32.xlu0 %v1114, 123
        %v1190 = vpop.permute.xlu0 %1189
        %1191 = vrot.lane.b32.xlu0 %v1116, 123
        %v1192 = vpop.permute.xlu0 %1191
        %1209 = vmatpush.msra.mxu0 %v1110
        %1210 = vmatpush.msra.mxu0 %v1108
        %1211 = vmatpush.msra.mxu0 %v1104
        %1212 = vmatpush.msra.mxu0 %v1102
        %1213 = vmatpush.msra.mxu0 %v1098
        %1214 = vmatpush.msra.mxu0 %v1096
        %1215 = vmatpush.msra.mxu0 %v1090
        %1216 = vmatpush.msra.mxu0 %v1088
        %1217 = vmatpush.msra.mxu0 %v1082
        %1218 = vmatpush.msra.mxu0 %v1080
        %1219 = vmatpush.msra.mxu0 %v1076
        %1220 = vmatpush.msra.mxu0 %v1075
        %1221 = vmatpush.msra.mxu0 %v1074
        %1222 = vmatpush.msra.mxu0 %v1073
        %1223 = vmatpush.msra.mxu0 %v1072
        %1224 = vmatpush.msra.mxu0 %v1071
        %1225 = vmatmul.f32.gmra.mxu0 %v180
        %v1226 = vpop.f32.mrf.mxu0
        %v1227 = vadd.f32 %v355, %v1226
        %1228 = vmatmul.f32.gmra.mxu0 %v183
        %v1229 = vpop.f32.mrf.mxu0
        %v1230 = vadd.f32 %v360, %v1229
        %1231 = vmatmul.f32.gmra.mxu0 %v186
        %v1232 = vpop.f32.mrf.mxu0
        %v1233 = vadd.f32 %v365, %v1232
        %1234 = vmatmul.f32.gmra.mxu0 %v189
        %v1235 = vpop.f32.mrf.mxu0
        %v1236 = vadd.f32 %v370, %v1235
        %1237 = vmatmul.f32.gmra.mxu0 %v192
        %v1238 = vpop.f32.mrf.mxu0
        %v1239 = vadd.f32 %v375, %v1238
        %1240 = vmatmul.f32.gmra.mxu0 %v195
        %v1241 = vpop.f32.mrf.mxu0
        %v1242 = vadd.f32 %v380, %v1241
        %1243 = vmatmul.f32.gmra.mxu0 %v198
        %v1244 = vpop.f32.mrf.mxu0
        %v1245 = vadd.f32 %v385, %v1244
        %1246 = vmatmul.f32.gmra.mxu0 %v201
        %v1247 = vpop.f32.mrf.mxu0
        %v1248 = vadd.f32 %v390, %v1247
        %1249 = vdwg.mxu0
        %1250 = vmatpush.msra.mxu0 %v1158
        %1251 = vmatpush.msra.mxu0 %v1156
        %1252 = vmatpush.msra.mxu0 %v1152
        %1253 = vmatpush.msra.mxu0 %v1150
        %1254 = vmatpush.msra.mxu0 %v1146
        %1255 = vmatpush.msra.mxu0 %v1144
        %1256 = vmatpush.msra.mxu0 %v1140
        %1257 = vmatpush.msra.mxu0 %v1138
        %1258 = vmatpush.msra.mxu0 %v1134
        %1259 = vmatpush.msra.mxu0 %v1132
        %1260 = vmatpush.msra.mxu0 %v1128
        %1261 = vmatpush.msra.mxu0 %v1126
        %1262 = vmatpush.msra.mxu0 %v1122
        %1263 = vmatpush.msra.mxu0 %v1120
        %1264 = vmatpush.msra.mxu0 %v1116
        %1265 = vmatpush.msra.mxu0 %v1114
        %1266 = vmatmul.f32.gmra.mxu0 %v181
        %v1267 = vpop.f32.mrf.mxu0
        %v1268 = vadd.f32 %v1227, %v1267
        %1269 = vmatmul.f32.gmra.mxu0 %v184
        %v1270 = vpop.f32.mrf.mxu0
        %v1271 = vadd.f32 %v1230, %v1270
        %1272 = vmatmul.f32.gmra.mxu0 %v187
        %v1273 = vpop.f32.mrf.mxu0
        %v1274 = vadd.f32 %v1233, %v1273
        %1275 = vmatmul.f32.gmra.mxu0 %v190
        %v1276 = vpop.f32.mrf.mxu0
        %v1277 = vadd.f32 %v1236, %v1276
        %1278 = vmatmul.f32.gmra.mxu0 %v193
        %v1279 = vpop.f32.mrf.mxu0
        %v1280 = vadd.f32 %v1239, %v1279
        %1281 = vmatmul.f32.gmra.mxu0 %v196
        %v1282 = vpop.f32.mrf.mxu0
        %v1283 = vadd.f32 %v1242, %v1282
        %1284 = vmatmul.f32.gmra.mxu0 %v199
        %v1285 = vpop.f32.mrf.mxu0
        %v1286 = vadd.f32 %v1245, %v1285
        %1287 = vmatmul.f32.gmra.mxu0 %v202
        %v1288 = vpop.f32.mrf.mxu0
        %v1289 = vadd.f32 %v1248, %v1288
        %1290 = vdwg.mxu0
        %1291 = vmatpush.msra.mxu0 %v1192
        %1292 = vmatpush.msra.mxu0 %v1190
        %1293 = vmatpush.msra.mxu0 %v1188
        %1294 = vmatpush.msra.mxu0 %v1186
        %1295 = vmatpush.msra.mxu0 %v1184
        %1296 = vmatpush.msra.mxu0 %v1182
        %1297 = vmatpush.msra.mxu0 %v1180
        %1298 = vmatpush.msra.mxu0 %v1178
        %1299 = vmatpush.msra.mxu0 %v1176
        %1300 = vmatpush.msra.mxu0 %v1174
        %1301 = vmatpush.msra.mxu0 %v1172
        %1302 = vmatpush.msra.mxu0 %v1170
        %1303 = vmatpush.msra.mxu0 %v1168
        %1304 = vmatpush.msra.mxu0 %v1166
        %1305 = vmatpush.msra.mxu0 %v1164
        %1306 = vmatpush.msra.mxu0 %v1162
        %1307 = vmatmul.f32.gmra.mxu0 %v182
        %v1308 = vpop.f32.mrf.mxu0
        %v1309 = vadd.f32 %v1268, %v1308
        %1310 = vmatmul.f32.gmra.mxu0 %v185
        %v1311 = vpop.f32.mrf.mxu0
        %v1312 = vadd.f32 %v1271, %v1311
        %1313 = vmatmul.f32.gmra.mxu0 %v188
        %v1314 = vpop.f32.mrf.mxu0
        %v1315 = vadd.f32 %v1274, %v1314
        %1316 = vmatmul.f32.gmra.mxu0 %v191
        %v1317 = vpop.f32.mrf.mxu0
        %v1318 = vadd.f32 %v1277, %v1317
        %1319 = vmatmul.f32.gmra.mxu0 %v194
        %v1320 = vpop.f32.mrf.mxu0
        %v1321 = vadd.f32 %v1280, %v1320
        %1322 = vmatmul.f32.gmra.mxu0 %v197
        %v1323 = vpop.f32.mrf.mxu0
        %v1324 = vadd.f32 %v1283, %v1323
        %1325 = vmatmul.f32.gmra.mxu0 %v200
        %v1326 = vpop.f32.mrf.mxu0
        %v1327 = vadd.f32 %v1286, %v1326
        %1328 = vmatmul.f32.gmra.mxu0 %v203
        %v1329 = vpop.f32.mrf.mxu0
        %v1330 = vadd.f32 %v1289, %v1329
        %1331 = vdwg.mxu0
        %v1332 = vmul.f32 %v1309, %v1321
        %v1333 = vmul.f32 %v1312, %v1324
        %v1334 = vmul.f32 %v1315, %v1327
        %v1335 = vmul.f32 %v1318, %v1330
        %1336 = vst.msk [vmem:[%s173 + $0x18] sm:$0xff] %vm519, %v1332
        %1337 = vst.msk [vmem:[%s521 + $0x18] sm:$0xff] %vm519, %v1333
        %1338 = vst.msk [vmem:[%s523 + $0x18] sm:$0xff] %vm519, %v1334
        %1339 = vst.msk [vmem:[%s525 + $0x18] sm:$0xff] %vm519, %v1335
        %s1340 = sand.u32 %s104, 1
        %s1341 = sand.u32 %s104, 1
        %s1342 = smul.addr %s1341, 128
        %s1343 = scalar_lea.vmem [#allocation2], %s1342
        // Predicated region
        $region33: #{model_forward.1} parent=31 // pred_check
          %p1344 = pneg %p114
        $region34: #{model_forward.1} parent=31 // pred_check_branch
          %1346 = sbr.rel (%p1344) target = $region36
        $region35: #{model_forward.1} parent=31 // pred_region
          %s1347 = smul.u32 4, %s19
          %s1348 = smul.addr %s18, 32
          %s1349 = sadd.s32 %s1347, %s1348
          %s1350 = smul.addr %s1349, 8
          %s1351 = scalar_lea.vmem %s3, %s1350
          // Predicated region
          $region37: #{model_forward.1} parent=35 // pred_check
            _
          $region38: #{model_forward.1} parent=35 // pred_check_branch
            %1353 = sbr.rel (0) target = $region40
          $region39: #{model_forward.1} parent=35 // pred_region
            // Predicated region
            $region41: #{model_forward.1} parent=39 // pred_check
              _
            $region42: #{model_forward.1} parent=39 // pred_check_branch
              %1355 = sbr.rel (0) target = $region44
            $region43: #{model_forward.1} parent=39 // pred_region
              // Predicated region
              $region56: #{model_forward.1} parent=43 // pred_check
                _
              $region57: #{model_forward.1} parent=43 // pred_check_branch
                %1401 = sbr.rel (0) target = $region59
              $region58: #{model_forward.1} parent=43 // pred_region
                loop: start=0, step=1, limit=1
                $region60: #{model_forward.1} parent=58 // loop_pre_header
                  _
                $region61: #{model_forward.1} parent=58 // loop_header
                  %s1403 = sphi 0, %s1407
                  %p1404 = scmp.ge.s32.totalorder %s1403, 1
                  %s1408 = sphi %s1343, %s1343
                  %s1409 = sphi %s1351, %s1351
                $region62: #{model_forward.1} parent=58 // loop_header_branch
                  %1406 = sbr.rel (%p1404) target = $region66
                $region63: #{model_forward.1} parent=58 // loop_body
                  %v1410 = vld [vmem:[%s1408] sm:$0xff]
                  %1411 = vst [vmem:[%s1409] sm:$0xff] %v1410
                  %v1412 = vld [vmem:[%s1408 + $0x8] sm:$0xff]
                  %1413 = vst [vmem:[%s1409 + $0x8] sm:$0xff] %v1412
                  %v1414 = vld [vmem:[%s1408 + $0x10] sm:$0xff]
                  %1415 = vst [vmem:[%s1409 + $0x10] sm:$0xff] %v1414
                  %v1416 = vld [vmem:[%s1408 + $0x18] sm:$0xff]
                  %1417 = vst [vmem:[%s1409 + $0x18] sm:$0xff] %v1416
                  %v1418 = vld [vmem:[%s1408 + $0x20] sm:$0xff]
                  %1419 = vst [vmem:[%s1409 + $0x40] sm:$0xff] %v1418
                  %v1420 = vld [vmem:[%s1408 + $0x28] sm:$0xff]
                  %1421 = vst [vmem:[%s1409 + $0x48] sm:$0xff] %v1420
                  %v1422 = vld [vmem:[%s1408 + $0x30] sm:$0xff]
                  %1423 = vst [vmem:[%s1409 + $0x50] sm:$0xff] %v1422
                  %v1424 = vld [vmem:[%s1408 + $0x38] sm:$0xff]
                  %1425 = vst [vmem:[%s1409 + $0x58] sm:$0xff] %v1424
                  %v1426 = vld [vmem:[%s1408 + $0x40] sm:$0xff]
                  %1427 = vst [vmem:[%s1409 + $0x80] sm:$0xff] %v1426
                  %v1428 = vld [vmem:[%s1408 + $0x48] sm:$0xff]
                  %1429 = vst [vmem:[%s1409 + $0x88] sm:$0xff] %v1428
                  %v1430 = vld [vmem:[%s1408 + $0x50] sm:$0xff]
                  %1431 = vst [vmem:[%s1409 + $0x90] sm:$0xff] %v1430
                  %v1432 = vld [vmem:[%s1408 + $0x58] sm:$0xff]
                  %1433 = vst [vmem:[%s1409 + $0x98] sm:$0xff] %v1432
                  %v1434 = vld [vmem:[%s1408 + $0x60] sm:$0xff]
                  %1435 = vst [vmem:[%s1409 + $0xc0] sm:$0xff] %v1434
                  %v1436 = vld [vmem:[%s1408 + $0x68] sm:$0xff]
                  %1437 = vst [vmem:[%s1409 + $0xc8] sm:$0xff] %v1436
                  %v1438 = vld [vmem:[%s1408 + $0x70] sm:$0xff]
                  %1439 = vst [vmem:[%s1409 + $0xd0] sm:$0xff] %v1438
                  %v1440 = vld [vmem:[%s1408 + $0x78] sm:$0xff]
                  %1441 = vst [vmem:[%s1409 + $0xd8] sm:$0xff] %v1440
                $region64: #{model_forward.1} parent=58 // loop_footer
                  %s1407 = sadd.s32 1, %s1403
                $region65: #{model_forward.1} parent=58 // loop_footer_branch
                  %1402 = sbr.rel target = $region61
                $region66: #{model_forward.1} parent=58 // loop_exit
                  _
              $region59: #{model_forward.1} parent=43 // pred_fallthru
                _
              // Predicated region
              $region67: #{model_forward.1} parent=43 // pred_check
                _
              $region68: #{model_forward.1} parent=43 // pred_check_branch
                %1443 = sbr.rel target = $region70
              $region69: #{model_forward.1} parent=43 // pred_region
                _
              $region70: #{model_forward.1} parent=43 // pred_fallthru
                _
            $region44: #{model_forward.1} parent=39 // pred_fallthru
              _
            // Predicated region
            $region45: #{model_forward.1} parent=39 // pred_check
              _
            $region46: #{model_forward.1} parent=39 // pred_check_branch
              %1357 = sbr.rel target = $region48
            $region47: #{model_forward.1} parent=39 // pred_region
              %s1359 = ssub.s32 256, 1
              loop: start=0, step=1, limit=1
              $region49: #{model_forward.1} parent=47 // loop_pre_header
                _
              $region50: #{model_forward.1} parent=47 // loop_header
                %s1361 = sphi 0, %s1365
                %p1362 = scmp.ge.s32.totalorder %s1361, 1
                %s1366 = sphi %s1343, %s1343
                %s1367 = sphi %s1351, %s1351
              $region51: #{model_forward.1} parent=47 // loop_header_branch
                %1364 = sbr.rel (%p1362) target = $region55
              $region52: #{model_forward.1} parent=47 // loop_body
                %v1368 = vld [vmem:[%s1366] sm:%s1359]
                %1369 = vst [vmem:[%s1367] sm:%s1359] %v1368
                %v1370 = vld [vmem:[%s1366 + $0x8] sm:%s1359]
                %1371 = vst [vmem:[%s1367 + $0x8] sm:%s1359] %v1370
                %v1372 = vld [vmem:[%s1366 + $0x10] sm:%s1359]
                %1373 = vst [vmem:[%s1367 + $0x10] sm:%s1359] %v1372
                %v1374 = vld [vmem:[%s1366 + $0x18] sm:%s1359]
                %1375 = vst [vmem:[%s1367 + $0x18] sm:%s1359] %v1374
                %v1376 = vld [vmem:[%s1366 + $0x20] sm:%s1359]
                %1377 = vst [vmem:[%s1367 + $0x40] sm:%s1359] %v1376
                %v1378 = vld [vmem:[%s1366 + $0x28] sm:%s1359]
                %1379 = vst [vmem:[%s1367 + $0x48] sm:%s1359] %v1378
                %v1380 = vld [vmem:[%s1366 + $0x30] sm:%s1359]
                %1381 = vst [vmem:[%s1367 + $0x50] sm:%s1359] %v1380
                %v1382 = vld [vmem:[%s1366 + $0x38] sm:%s1359]
                %1383 = vst [vmem:[%s1367 + $0x58] sm:%s1359] %v1382
                %v1384 = vld [vmem:[%s1366 + $0x40] sm:%s1359]
                %1385 = vst [vmem:[%s1367 + $0x80] sm:%s1359] %v1384
                %v1386 = vld [vmem:[%s1366 + $0x48] sm:%s1359]
                %1387 = vst [vmem:[%s1367 + $0x88] sm:%s1359] %v1386
                %v1388 = vld [vmem:[%s1366 + $0x50] sm:%s1359]
                %1389 = vst [vmem:[%s1367 + $0x90] sm:%s1359] %v1388
                %v1390 = vld [vmem:[%s1366 + $0x58] sm:%s1359]
                %1391 = vst [vmem:[%s1367 + $0x98] sm:%s1359] %v1390
                %v1392 = vld [vmem:[%s1366 + $0x60] sm:%s1359]
                %1393 = vst [vmem:[%s1367 + $0xc0] sm:%s1359] %v1392
                %v1394 = vld [vmem:[%s1366 + $0x68] sm:%s1359]
                %1395 = vst [vmem:[%s1367 + $0xc8] sm:%s1359] %v1394
                %v1396 = vld [vmem:[%s1366 + $0x70] sm:%s1359]
                %1397 = vst [vmem:[%s1367 + $0xd0] sm:%s1359] %v1396
                %v1398 = vld [vmem:[%s1366 + $0x78] sm:%s1359]
                %1399 = vst [vmem:[%s1367 + $0xd8] sm:%s1359] %v1398
              $region53: #{model_forward.1} parent=47 // loop_footer
                %s1365 = sadd.s32 1, %s1361
              $region54: #{model_forward.1} parent=47 // loop_footer_branch
                %1360 = sbr.rel target = $region50
              $region55: #{model_forward.1} parent=47 // loop_exit
                _
            $region48: #{model_forward.1} parent=39 // pred_fallthru
              _
          $region40: #{model_forward.1} parent=35 // pred_fallthru
            _
          %1444 = vnop
        $region36: #{model_forward.1} parent=31 // pred_fallthru
          _
      $region32: #{model_forward.1} parent=5 // pred_fallthru
        _
      %p1445 = scmp.le.s32.totalorder 2, %s9
      // Predicated region
      $region71: #{model_forward.1} parent=5 // pred_check
        %p1446 = pneg %p1445
      $region72: #{model_forward.1} parent=5 // pred_check_branch
        %1448 = sbr.rel (%p1446) target = $region74
      $region73: #{model_forward.1} parent=5 // pred_region
        %s1449 = ssub.s32 %s9, 2
        // Predicated region
        $region75: #{model_forward.1} parent=73 // pred_check
          %p1450 = pneg %p120
        $region76: #{model_forward.1} parent=73 // pred_check_branch
          %1452 = sbr.rel (%p1450) target = $region78
        $region77: #{model_forward.1} parent=73 // pred_region
          %s1453 = sand.u32 %s105, 1
          %s1454 = sand.u32 %s105, 1
          %s1455 = smul.addr %s1454, 128
          %s1456 = scalar_lea.vmem [#allocation2], %s1455
        $region78: #{model_forward.1} parent=73 // pred_fallthru
          _
      $region74: #{model_forward.1} parent=5 // pred_fallthru
        _
    $region6: #{model_forward.1} parent=1 // loop_footer
      %s13 = sadd.s32 1, %s9
    $region7: #{model_forward.1} parent=1 // loop_footer_branch
      %8 = sbr.rel target = $region3
    $region8: #{model_forward.1} parent=1 // loop_exit
      _

</llo_original>
